<compile_context>
chip_gen: v5e
topology: v5e:2x2
jax: 0.10.0
libtpu: 0.0.40
codegen_flags: <defaults>
</compile_context>

<pallas_src>
import functools

import jax
import jax.numpy as jnp
from jax.experimental import pallas as pl
from jax.experimental.pallas import tpu as pltpu

_BN_EPS = 1e-5


def _images_per_block(n_images, rows_per_image, row_cap):
    """Largest divisor B of n_images with B * rows_per_image <= row_cap (at least 1)."""
    best = 1
    for cand in range(1, n_images + 1):
        if n_images % cand == 0 and cand * rows_per_image <= row_cap:
            best = cand
    return best


def _banded_weights(w, W):
    """(3,3,Cin,Cout) filter -> (3, W*Cin, W*Cout) block-banded bf16 weights.

    Band kh realises: out[h, w_out*Cout+co] += sum_{kw,ci} x[h+kh-1, w_in*Cin+ci] * w[kh,kw,ci,co]
    with w_in = w_out + kw - 1; out-of-range w_in is simply absent (== implicit zero
    padding along width).  Built once per conv from the parameters.
    """
    bands = []
    for kh in range(3):
        band = sum(jnp.kron(jnp.eye(W, W, k=1 - kw, dtype=jnp.float32),
                            w[kh, kw].astype(jnp.float32))
                   for kw in range(3))
        bands.append(band)
    return jnp.stack(bands).astype(jnp.bfloat16)


def _lane_fold(v, W):
    """Per-channel (C,) vector -> lane-folded (1, 1, W*C) vector (lane index = w*C + c)."""
    return jnp.tile(v, (W,)).reshape(1, 1, -1)


# ----------------------------------------------------------------------------------
# Kernel 1: 3x3 conv as 3 block-banded GEMMs on the lane-folded layout, M-batched over
#           B images per grid step; emits per-image column sums / sums-of-squares for
#           BatchNorm statistics and SE pooling.  Optionally fuses the previous layer's
#           BatchNorm-apply + ReLU into the input load path.
# ----------------------------------------------------------------------------------
def _conv3x3_kernel(B, H, fuse_bn_relu, *refs):
    if fuse_bn_relu:
        x_ref, sc_ref, sh_ref, w_ref, y_ref, s_ref, ss_ref = refs
    else:
        x_ref, w_ref, y_ref, s_ref, ss_ref = refs
    L = x_ref.shape[-1]          # W * Cin  (== 128 here)
    Lout = w_ref.shape[-1]       # W * Cout

    acc = None
    for dy in range(3):                                         # vertical taps
        xs = x_ref[:, dy:dy + H, :].astype(jnp.float32)         # (B, H, L)
        if fuse_bn_relu:
            # BatchNorm1 + ReLU fused into the conv2 load path.
            xs = jnp.maximum(xs * sc_ref[...] + sh_ref[...], 0.0)
            if dy != 1:
                # This dy-slice touches one vertically padded row per image; it must stay
                # an exact zero (padding of the *post*-ReLU activation), so mask it back.
                pad_row = 0 if dy == 0 else H - 1
                h_idx = jax.lax.broadcasted_iota(jnp.int32, (B, H, 1), 1)
                xs = jnp.where(h_idx == pad_row, 0.0, xs)
        lhs = xs.astype(jnp.bfloat16).reshape(B * H, L)          # M-batched MXU operand
        part = jnp.dot(lhs, w_ref[dy], preferred_element_type=jnp.float32)
        acc = part if acc is None else acc + part

    acc3 = acc.reshape(B, H, Lout)
    y_ref[...] = acc3.astype(y_ref.dtype)                        # bf16 pre-BN output
    s_ref[...] = jnp.sum(acc3, axis=1, keepdims=True)            # f32 stats
    ss_ref[...] = jnp.sum(acc3 * acc3, axis=1, keepdims=True)


def conv3x3(x_nhl, w_band, *, bn_scale=None, bn_shift=None,
            out_dtype=jnp.bfloat16, row_cap=512):
    """3x3 / stride-1 / pad-1 conv on the lane-folded (N, H, W*Cin) layout.

    Conv bias intentionally omitted (cancels exactly under training-mode BatchNorm).
    Returns (pre-BN output (N,H,W*Cout), per-image column sums (N,1,W*Cout) f32,
    per-image column sums of squares (N,1,W*Cout) f32).
    """
    N, H, L = x_nhl.shape
    Lout = w_band.shape[-1]
    B = _images_per_block(N, H + 2, row_cap)
    fuse = bn_scale is not None

    # Only the vertical zero-pad is materialised; the width pad lives in the band.
    # TODO(synk): the vertical pad is still one wrapper-level HBM pass per conv; it could
    # move in-kernel (row-masked taps) if H*W ever grows enough for that pass to matter.
    xp = jnp.pad(x_nhl, ((0, 0), (1, 1), (0, 0)))

    kernel = functools.partial(_conv3x3_kernel, B, H, fuse)
    in_specs = [pl.BlockSpec((B, H + 2, L), lambda i: (i, 0, 0))]
    args = [xp]
    if fuse:
        in_specs += [pl.BlockSpec((1, 1, L), lambda i: (0, 0, 0)),
                     pl.BlockSpec((1, 1, L), lambda i: (0, 0, 0))]
        args += [bn_scale.reshape(1, 1, L), bn_shift.reshape(1, 1, L)]
    in_specs += [pl.BlockSpec((3, L, Lout), lambda i: (0, 0, 0))]   # resident weights
    args += [w_band]

    return pl.pallas_call(
        kernel,
        grid=(N // B,),
        in_specs=in_specs,
        out_specs=(
            pl.BlockSpec((B, H, Lout), lambda i: (i, 0, 0)),
            pl.BlockSpec((B, 1, Lout), lambda i: (i, 0, 0)),
            pl.BlockSpec((B, 1, Lout), lambda i: (i, 0, 0)),
        ),
        out_shape=(
            jax.ShapeDtypeStruct((N, H, Lout), out_dtype),
            jax.ShapeDtypeStruct((N, 1, Lout), jnp.float32),
            jax.ShapeDtypeStruct((N, 1, Lout), jnp.float32),
        ),
        compiler_params=pltpu.CompilerParams(dimension_semantics=("parallel",)),
    )(*args)


# ----------------------------------------------------------------------------------
# Tiny scalar glue: fold batch statistics into per-channel scale / shift (training-mode
# BatchNorm: batch stats, biased variance, eps = 1e-5).
# ----------------------------------------------------------------------------------
def _bn_affine(colsum, colsumsq, gamma, beta, count, W, C):
    ch_sum = colsum.reshape(-1, W, C).sum(axis=(0, 1))
    ch_sumsq = colsumsq.reshape(-1, W, C).sum(axis=(0, 1))
    mean = ch_sum / count
    var = jnp.maximum(ch_sumsq / count - mean * mean, 0.0)
    scale = gamma * jax.lax.rsqrt(var + _BN_EPS)
    shift = beta - mean * scale
    return scale, shift


# ----------------------------------------------------------------------------------
# Kernel 2 (tail): BN2-apply + SE channel gate + residual add + ReLU + dropout(p=0.3),
#                  fused over (B, H, W*C) lane-dense blocks.
# ----------------------------------------------------------------------------------
def _tail_kernel(B, H, L, keep_thresh, inv_keep,
                 y_ref, x_ref, sc_ref, sh_ref, g_ref, seed_ref, o_ref):
    i = pl.program_id(0)
    y2 = y_ref[...].astype(jnp.float32) * sc_ref[...] + sh_ref[...]   # BatchNorm2
    out = y2 * g_ref[...] + x_ref[...]                                # SE gate + residual
    out = jnp.maximum(out, 0.0)                                       # ReLU
    # Dropout p=0.3 (training semantics). Counter-based hash PRNG keyed on
    # (seed, global element index) -> per-block unique and tiling-invariant.
    b_idx = jax.lax.broadcasted_iota(jnp.int32, (B, H, L), 0)
    h_idx = jax.lax.broadcasted_iota(jnp.int32, (B, H, L), 1)
    l_idx = jax.lax.broadcasted_iota(jnp.int32, (B, H, L), 2)
    idx = (((i * B + b_idx) * H + h_idx) * L + l_idx).astype(jnp.uint32)
    h = idx + seed_ref[0].astype(jnp.uint32) * jnp.uint32(0x9E3779B1)
    h = (h ^ (h >> 16)) * jnp.uint32(0x7FEB352D)
    h = (h ^ (h >> 15)) * jnp.uint32(0x846CA68B)
    h = h ^ (h >> 16)
    r = (h >> 8).astype(jnp.int32)                                    # uniform in [0, 2^24)
    o_ref[...] = jnp.where(r < keep_thresh, out * inv_keep, 0.0)


def bn_se_residual_dropout(y2_pre, x_res, scale_l, shift_l, gate_l, seed, *, p=0.3,
                           row_cap=1024):
    N, H, L = y2_pre.shape
    B = _images_per_block(N, H, row_cap)
    keep = 1.0 - p
    kernel = functools.partial(_tail_kernel, B, H, L,
                               int(round(keep * (1 << 24))), float(1.0 / keep))
    return pl.pallas_call(
        kernel,
        grid=(N // B,),
        in_specs=[
            pl.BlockSpec((B, H, L), lambda i: (i, 0, 0)),
            pl.BlockSpec((B, H, L), lambda i: (i, 0, 0)),
            pl.BlockSpec((1, 1, L), lambda i: (0, 0, 0)),
            pl.BlockSpec((1, 1, L), lambda i: (0, 0, 0)),
            pl.BlockSpec((B, 1, L), lambda i: (i, 0, 0)),
            pl.BlockSpec(memory_space=pltpu.MemorySpace.SMEM),
        ],
        out_specs=pl.BlockSpec((B, H, L), lambda i: (i, 0, 0)),
        out_shape=jax.ShapeDtypeStruct((N, H, L), jnp.float32),
        compiler_params=pltpu.CompilerParams(dimension_semantics=("parallel",)),
    )(y2_pre, x_res, scale_l, shift_l, gate_l, seed)


# ----------------------------------------------------------------------------------
# Parameters + forward pass
# ----------------------------------------------------------------------------------
def init_params(key, in_channels, out_channels, reduction=16):
    c_red = max(1, out_channels // reduction)
    ks = jax.random.split(key, 8)
    return {
        "w1": 0.1 * jax.random.normal(ks[0], (3, 3, in_channels, out_channels), jnp.float32),
        # conv biases exist in the torch module but cancel exactly under training-mode BN,
        # so they are intentionally never applied.
        "b1": 0.1 * jax.random.normal(ks[1], (out_channels,), jnp.float32),
        "gamma1": jnp.ones((out_channels,), jnp.float32),
        "beta1": jnp.zeros((out_channels,), jnp.float32),
        "w2": 0.1 * jax.random.normal(ks[2], (3, 3, out_channels, out_channels), jnp.float32),
        "b2": 0.1 * jax.random.normal(ks[3], (out_channels,), jnp.float32),
        "gamma2": jnp.ones((out_channels,), jnp.float32),
        "beta2": jnp.zeros((out_channels,), jnp.float32),
        # SE block: 1x1 convs == per-channel linears
        "wfc1": 0.1 * jax.random.normal(ks[4], (out_channels, c_red), jnp.float32),
        "bfc1": 0.1 * jax.random.normal(ks[5], (1, c_red), jnp.float32),
        "wfc2": 0.1 * jax.random.normal(ks[6], (c_red, out_channels), jnp.float32),
        "bfc2": 0.1 * jax.random.normal(ks[7], (1, out_channels), jnp.float32),
    }


def residual_block_forward(x_nchw, params, dropout_seed, p=0.3):
    N, Cin, H, W = x_nchw.shape
    Cout = params["w1"].shape[-1]
    assert Cin == Cout, "downsample=None requires in_channels == out_channels"
    count = N * H * W
    L = W * Cout

    # NCHW -> NHWC -> lane-folded (N, H, W*C); everything inside stays in this layout.
    x = jnp.transpose(x_nchw, (0, 2, 3, 1)).astype(jnp.float32).reshape(N, H, W * Cin)

    wb1 = _banded_weights(params["w1"], W)
    wb2 = _banded_weights(params["w2"], W)

    # conv1 (BN1 statistics emitted in-kernel)
    y1_pre, cs1, css1 = conv3x3(x, wb1)
    scale1, shift1 = _bn_affine(cs1, css1, params["gamma1"], params["beta1"], count, W, Cout)

    # conv2 with BN1-apply + ReLU fused into its input load path
    y2_pre, cs2, css2 = conv3x3(y1_pre, wb2,
                                bn_scale=_lane_fold(scale1, W),
                                bn_shift=_lane_fold(shift1, W))
    scale2, shift2 = _bn_affine(cs2, css2, params["gamma2"], params["beta2"], count, W, Cout)

    # SE gate from the conv2 column sums (global average pool; BN2 affine commutes with
    # the spatial mean).  Tiny (N, C) math -> plain jnp, fused into the scalar glue.
    pooled = cs2.reshape(N, W, Cout).sum(axis=1) / (H * W)          # pre-BN2 pooled means
    pooled = pooled * scale2 + shift2                               # post-BN2 pooled means
    hidden = jnp.maximum(pooled @ params["wfc1"] + params["bfc1"], 0.0)
    gate = jax.nn.sigmoid(hidden @ params["wfc2"] + params["bfc2"])  # (N, Cout)
    gate_l = jnp.tile(gate, (1, W)).reshape(N, 1, L)                 # lane-folded per image

    # BN2 + SE scale + residual + ReLU + dropout, fused & tiled
    seed = jnp.asarray(dropout_seed, dtype=jnp.int32).reshape((1,))
    out = bn_se_residual_dropout(y2_pre, x,
                                 _lane_fold(scale2, W), _lane_fold(shift2, W),
                                 gate_l, seed, p=p)

    # lane-folded -> NHWC -> NCHW
    return jnp.transpose(out.reshape(N, H, W, Cout), (0, 3, 1, 2))


if __name__ == "__main__":
    N, C, H, W = 2, 8, 16, 16      # in_channels == out_channels (downsample=None); W*C = 128
    x = jax.random.normal(jax.random.PRNGKey(0), (N, C, H, W), jnp.float32)
    params = init_params(jax.random.PRNGKey(42), in_channels=C, out_channels=C)

    fwd = jax.jit(residual_block_forward)
    out = jax.block_until_ready(fwd(x, params, 1234))

    assert out.shape == (N, C, H, W)
    assert bool(jnp.all(jnp.isfinite(out)))
    print("KERNEL_OK")
</pallas_src>

<mosaic_0001>
module attributes {stable_mosaic.version = 11 : i64} {
  func.func @_conv3x3_kernel(%arg0: i32, %arg1: memref<2x18x128xf32, #tpu.memory_space<vmem>>, %arg2: memref<3x128x128xbf16, #tpu.memory_space<vmem>>, %arg3: memref<2x16x128xbf16, #tpu.memory_space<vmem>>, %arg4: memref<2x1x128xf32, #tpu.memory_space<vmem>>, %arg5: memref<2x1x128xf32, #tpu.memory_space<vmem>>) attributes {dimension_semantics = [#tpu.dimension_semantics<parallel>], iteration_bounds = array<i64: 1>, scalar_prefetch = 0 : i64, scratch_operands = 0 : i64, tpu.core_type = #tpu.core_type<tc>, window_params = [{transform_indices = @transform_0, window_bounds = array<i64: 2, 18, 128>}, {pipeline_mode = #tpu.pipeline_mode<synchronous>, transform_indices = @transform_1, window_bounds = array<i64: 3, 128, 128>}, {transform_indices = @transform_2, window_bounds = array<i64: 2, 16, 128>}, {transform_indices = @transform_3, window_bounds = array<i64: 2, 1, 128>}, {transform_indices = @transform_4, window_bounds = array<i64: 2, 1, 128>}]} {
    %c0 = arith.constant 0 : index
    %c0_0 = arith.constant 0 : index
    %c0_1 = arith.constant 0 : index
    %0 = vector.load %arg1[%c0, %c0_0, %c0_1] : memref<2x18x128xf32, #tpu.memory_space<vmem>>, vector<2x16x128xf32>
    %1 = arith.truncf %0 : vector<2x16x128xf32> to vector<2x16x128xbf16>
    %2 = vector.shape_cast %1 : vector<2x16x128xbf16> to vector<32x128xbf16>
    %c0_2 = arith.constant 0 : index
    %c0_3 = arith.constant 0 : index
    %c0_4 = arith.constant 0 : index
    %3 = vector.load %arg2[%c0_2, %c0_3, %c0_4] : memref<3x128x128xbf16, #tpu.memory_space<vmem>>, vector<1x128x128xbf16>
    %4 = vector.shape_cast %3 : vector<1x128x128xbf16> to vector<128x128xbf16>
    %cst = arith.constant dense<0.000000e+00> : vector<32x128xf32>
    %5 = tpu.matmul %2, %4, %cst {dimension_numbers = #tpu.dot_dimension_numbers<[1], [0], [0], [1], [0, 0, 1, 1], [], []>} : vector<32x128xbf16>, vector<128x128xbf16>, vector<32x128xf32> -> vector<32x128xf32>
    %c0_5 = arith.constant 0 : index
    %c1 = arith.constant 1 : index
    %c0_6 = arith.constant 0 : index
    %6 = vector.load %arg1[%c0_5, %c1, %c0_6] : memref<2x18x128xf32, #tpu.memory_space<vmem>>, vector<2x16x128xf32>
    %7 = arith.truncf %6 : vector<2x16x128xf32> to vector<2x16x128xbf16>
    %8 = vector.shape_cast %7 : vector<2x16x128xbf16> to vector<32x128xbf16>
    %c1_7 = arith.constant 1 : index
    %c0_8 = arith.constant 0 : index
    %c0_9 = arith.constant 0 : index
    %9 = vector.load %arg2[%c1_7, %c0_8, %c0_9] : memref<3x128x128xbf16, #tpu.memory_space<vmem>>, vector<1x128x128xbf16>
    %10 = vector.shape_cast %9 : vector<1x128x128xbf16> to vector<128x128xbf16>
    %cst_10 = arith.constant dense<0.000000e+00> : vector<32x128xf32>
    %11 = tpu.matmul %8, %10, %cst_10 {dimension_numbers = #tpu.dot_dimension_numbers<[1], [0], [0], [1], [0, 0, 1, 1], [], []>} : vector<32x128xbf16>, vector<128x128xbf16>, vector<32x128xf32> -> vector<32x128xf32>
    %12 = arith.addf %5, %11 : vector<32x128xf32>
    %c0_11 = arith.constant 0 : index
    %c2 = arith.constant 2 : index
    %c0_12 = arith.constant 0 : index
    %13 = vector.load %arg1[%c0_11, %c2, %c0_12] : memref<2x18x128xf32, #tpu.memory_space<vmem>>, vector<2x16x128xf32>
    %14 = arith.truncf %13 : vector<2x16x128xf32> to vector<2x16x128xbf16>
    %15 = vector.shape_cast %14 : vector<2x16x128xbf16> to vector<32x128xbf16>
    %c2_13 = arith.constant 2 : index
    %c0_14 = arith.constant 0 : index
    %c0_15 = arith.constant 0 : index
    %16 = vector.load %arg2[%c2_13, %c0_14, %c0_15] : memref<3x128x128xbf16, #tpu.memory_space<vmem>>, vector<1x128x128xbf16>
    %17 = vector.shape_cast %16 : vector<1x128x128xbf16> to vector<128x128xbf16>
    %cst_16 = arith.constant dense<0.000000e+00> : vector<32x128xf32>
    %18 = tpu.matmul %15, %17, %cst_16 {dimension_numbers = #tpu.dot_dimension_numbers<[1], [0], [0], [1], [0, 0, 1, 1], [], []>} : vector<32x128xbf16>, vector<128x128xbf16>, vector<32x128xf32> -> vector<32x128xf32>
    %19 = arith.addf %12, %18 : vector<32x128xf32>
    %20 = vector.shape_cast %19 : vector<32x128xf32> to vector<2x16x128xf32>
    %21 = arith.truncf %20 : vector<2x16x128xf32> to vector<2x16x128xbf16>
    %c0_17 = arith.constant 0 : index
    %c0_18 = arith.constant 0 : index
    %c0_19 = arith.constant 0 : index
    %22 = vector.load %arg3[%c0_17, %c0_18, %c0_19] : memref<2x16x128xbf16, #tpu.memory_space<vmem>>, vector<2x16x128xbf16>
    tpu.vector_store %arg3[%c0_17, %c0_18, %c0_19], %21 {strides = array<i32>} : memref<2x16x128xbf16, #tpu.memory_space<vmem>>, vector<2x16x128xbf16>,
    %cst_20 = arith.constant dense<0.000000e+00> : vector<2x128xf32>
    %23 = vector.multi_reduction <add>, %20, %cst_20 [1] : vector<2x16x128xf32> to vector<2x128xf32>
    %24 = vector.shape_cast %23 : vector<2x128xf32> to vector<2x1x128xf32>
    %c0_21 = arith.constant 0 : index
    %c0_22 = arith.constant 0 : index
    %c0_23 = arith.constant 0 : index
    %25 = vector.load %arg4[%c0_21, %c0_22, %c0_23] : memref<2x1x128xf32, #tpu.memory_space<vmem>>, vector<2x1x128xf32>
    tpu.vector_store %arg4[%c0_21, %c0_22, %c0_23], %24 {strides = array<i32>} : memref<2x1x128xf32, #tpu.memory_space<vmem>>, vector<2x1x128xf32>,
    %26 = arith.mulf %20, %20 : vector<2x16x128xf32>
    %cst_24 = arith.constant dense<0.000000e+00> : vector<2x128xf32>
    %27 = vector.multi_reduction <add>, %26, %cst_24 [1] : vector<2x16x128xf32> to vector<2x128xf32>
    %28 = vector.shape_cast %27 : vector<2x128xf32> to vector<2x1x128xf32>
    %c0_25 = arith.constant 0 : index
    %c0_26 = arith.constant 0 : index
    %c0_27 = arith.constant 0 : index
    %29 = vector.load %arg5[%c0_25, %c0_26, %c0_27] : memref<2x1x128xf32, #tpu.memory_space<vmem>>, vector<2x1x128xf32>
    tpu.vector_store %arg5[%c0_25, %c0_26, %c0_27], %28 {strides = array<i32>} : memref<2x1x128xf32, #tpu.memory_space<vmem>>, vector<2x1x128xf32>,
    return
  }
  func.func @transform_0(%arg0: i32) -> (i32, i32, i32) {
    %c0_i32 = arith.constant 0 : i32
    %c0_i32_0 = arith.constant 0 : i32
    %c0_i32_1 = arith.constant 0 : i32
    return %arg0, %c0_i32, %c0_i32_0 : i32, i32, i32
  }
  func.func @transform_1(%arg0: i32) -> (i32, i32, i32) {
    %c0_i32 = arith.constant 0 : i32
    %c0_i32_0 = arith.constant 0 : i32
    %c0_i32_1 = arith.constant 0 : i32
    %c0_i32_2 = arith.constant 0 : i32
    return %c0_i32, %c0_i32_0, %c0_i32_1 : i32, i32, i32
  }
  func.func @transform_2(%arg0: i32) -> (i32, i32, i32) {
    %c0_i32 = arith.constant 0 : i32
    %c0_i32_0 = arith.constant 0 : i32
    %c0_i32_1 = arith.constant 0 : i32
    return %arg0, %c0_i32, %c0_i32_0 : i32, i32, i32
  }
  func.func @transform_3(%arg0: i32) -> (i32, i32, i32) {
    %c0_i32 = arith.constant 0 : i32
    %c0_i32_0 = arith.constant 0 : i32
    %c0_i32_1 = arith.constant 0 : i32
    return %arg0, %c0_i32, %c0_i32_0 : i32, i32, i32
  }
  func.func @transform_4(%arg0: i32) -> (i32, i32, i32) {
    %c0_i32 = arith.constant 0 : i32
    %c0_i32_0 = arith.constant 0 : i32
    %c0_i32_1 = arith.constant 0 : i32
    return %arg0, %c0_i32, %c0_i32_0 : i32, i32, i32
  }
}

module attributes {stable_mosaic.version = 11 : i64} {
  func.func @_conv3x3_kernel(%arg0: i32, %arg1: memref<2x18x128xbf16, #tpu.memory_space<vmem>>, %arg2: memref<1x1x128xf32, #tpu.memory_space<vmem>>, %arg3: memref<1x1x128xf32, #tpu.memory_space<vmem>>, %arg4: memref<3x128x128xbf16, #tpu.memory_space<vmem>>, %arg5: memref<2x16x128xbf16, #tpu.memory_space<vmem>>, %arg6: memref<2x1x128xf32, #tpu.memory_space<vmem>>, %arg7: memref<2x1x128xf32, #tpu.memory_space<vmem>>) attributes {dimension_semantics = [#tpu.dimension_semantics<parallel>], iteration_bounds = array<i64: 1>, scalar_prefetch = 0 : i64, scratch_operands = 0 : i64, tpu.core_type = #tpu.core_type<tc>, window_params = [{transform_indices = @transform_0, window_bounds = array<i64: 2, 18, 128>}, {pipeline_mode = #tpu.pipeline_mode<synchronous>, transform_indices = @transform_1, window_bounds = array<i64: 1, 1, 128>}, {pipeline_mode = #tpu.pipeline_mode<synchronous>, transform_indices = @transform_2, window_bounds = array<i64: 1, 1, 128>}, {pipeline_mode = #tpu.pipeline_mode<synchronous>, transform_indices = @transform_3, window_bounds = array<i64: 3, 128, 128>}, {transform_indices = @transform_4, window_bounds = array<i64: 2, 16, 128>}, {transform_indices = @transform_5, window_bounds = array<i64: 2, 1, 128>}, {transform_indices = @transform_6, window_bounds = array<i64: 2, 1, 128>}]} {
    %c0 = arith.constant 0 : index
    %c0_0 = arith.constant 0 : index
    %c0_1 = arith.constant 0 : index
    %0 = vector.load %arg1[%c0, %c0_0, %c0_1] : memref<2x18x128xbf16, #tpu.memory_space<vmem>>, vector<2x16x128xbf16>
    %1 = arith.extf %0 : vector<2x16x128xbf16> to vector<2x16x128xf32>
    %c0_2 = arith.constant 0 : index
    %c0_3 = arith.constant 0 : index
    %c0_4 = arith.constant 0 : index
    %2 = vector.load %arg2[%c0_2, %c0_3, %c0_4] : memref<1x1x128xf32, #tpu.memory_space<vmem>>, vector<1x1x128xf32>
    %3 = vector.broadcast %2 : vector<1x1x128xf32> to vector<2x16x128xf32>
    %4 = arith.mulf %1, %3 : vector<2x16x128xf32>
    %c0_5 = arith.constant 0 : index
    %c0_6 = arith.constant 0 : index
    %c0_7 = arith.constant 0 : index
    %5 = vector.load %arg3[%c0_5, %c0_6, %c0_7] : memref<1x1x128xf32, #tpu.memory_space<vmem>>, vector<1x1x128xf32>
    %6 = vector.broadcast %5 : vector<1x1x128xf32> to vector<2x16x128xf32>
    %7 = arith.addf %4, %6 : vector<2x16x128xf32>
    %cst = arith.constant 0.000000e+00 : f32
    %8 = vector.broadcast %cst : f32 to vector<2x16x128xf32>
    %9 = arith.maximumf %7, %8 : vector<2x16x128xf32>
    %10 = tpu.iota {dimensions = array<i32: 1>} : vector<2x16x1xi32>
    %c0_i32 = arith.constant 0 : i32
    %11 = vector.broadcast %c0_i32 : i32 to vector<2x16x1xi32>
    %12 = arith.cmpi eq, %10, %11 : vector<2x16x1xi32>
    %cst_8 = arith.constant 0.000000e+00 : f32
    %13 = vector.shape_cast %12 : vector<2x16x1xi1> to vector<2x16x1xi1>
    %14 = vector.broadcast %13 : vector<2x16x1xi1> to vector<2x16x128xi1>
    %15 = vector.broadcast %cst_8 : f32 to vector<2x16x128xf32>
    %16 = arith.select %14, %15, %9 : vector<2x16x128xi1>, vector<2x16x128xf32>
    %17 = arith.truncf %16 : vector<2x16x128xf32> to vector<2x16x128xbf16>
    %18 = vector.shape_cast %17 : vector<2x16x128xbf16> to vector<32x128xbf16>
    %c0_9 = arith.constant 0 : index
    %c0_10 = arith.constant 0 : index
    %c0_11 = arith.constant 0 : index
    %19 = vector.load %arg4[%c0_9, %c0_10, %c0_11] : memref<3x128x128xbf16, #tpu.memory_space<vmem>>, vector<1x128x128xbf16>
    %20 = vector.shape_cast %19 : vector<1x128x128xbf16> to vector<128x128xbf16>
    %cst_12 = arith.constant dense<0.000000e+00> : vector<32x128xf32>
    %21 = tpu.matmul %18, %20, %cst_12 {dimension_numbers = #tpu.dot_dimension_numbers<[1], [0], [0], [1], [0, 0, 1, 1], [], []>} : vector<32x128xbf16>, vector<128x128xbf16>, vector<32x128xf32> -> vector<32x128xf32>
    %c0_13 = arith.constant 0 : index
    %c1 = arith.constant 1 : index
    %c0_14 = arith.constant 0 : index
    %22 = vector.load %arg1[%c0_13, %c1, %c0_14] : memref<2x18x128xbf16, #tpu.memory_space<vmem>>, vector<2x16x128xbf16>
    %23 = arith.extf %22 : vector<2x16x128xbf16> to vector<2x16x128xf32>
    %c0_15 = arith.constant 0 : index
    %c0_16 = arith.constant 0 : index
    %c0_17 = arith.constant 0 : index
    %24 = vector.load %arg2[%c0_15, %c0_16, %c0_17] : memref<1x1x128xf32, #tpu.memory_space<vmem>>, vector<1x1x128xf32>
    %25 = vector.broadcast %24 : vector<1x1x128xf32> to vector<2x16x128xf32>
    %26 = arith.mulf %23, %25 : vector<2x16x128xf32>
    %c0_18 = arith.constant 0 : index
    %c0_19 = arith.constant 0 : index
    %c0_20 = arith.constant 0 : index
    %27 = vector.load %arg3[%c0_18, %c0_19, %c0_20] : memref<1x1x128xf32, #tpu.memory_space<vmem>>, vector<1x1x128xf32>
    %28 = vector.broadcast %27 : vector<1x1x128xf32> to vector<2x16x128xf32>
    %29 = arith.addf %26, %28 : vector<2x16x128xf32>
    %cst_21 = arith.constant 0.000000e+00 : f32
    %30 = vector.broadcast %cst_21 : f32 to vector<2x16x128xf32>
    %31 = arith.maximumf %29, %30 : vector<2x16x128xf32>
    %32 = arith.truncf %31 : vector<2x16x128xf32> to vector<2x16x128xbf16>
    %33 = vector.shape_cast %32 : vector<2x16x128xbf16> to vector<32x128xbf16>
    %c1_22 = arith.constant 1 : index
    %c0_23 = arith.constant 0 : index
    %c0_24 = arith.constant 0 : index
    %34 = vector.load %arg4[%c1_22, %c0_23, %c0_24] : memref<3x128x128xbf16, #tpu.memory_space<vmem>>, vector<1x128x128xbf16>
    %35 = vector.shape_cast %34 : vector<1x128x128xbf16> to vector<128x128xbf16>
    %cst_25 = arith.constant dense<0.000000e+00> : vector<32x128xf32>
    %36 = tpu.matmul %33, %35, %cst_25 {dimension_numbers = #tpu.dot_dimension_numbers<[1], [0], [0], [1], [0, 0, 1, 1], [], []>} : vector<32x128xbf16>, vector<128x128xbf16>, vector<32x128xf32> -> vector<32x128xf32>
    %37 = arith.addf %21, %36 : vector<32x128xf32>
    %c0_26 = arith.constant 0 : index
    %c2 = arith.constant 2 : index
    %c0_27 = arith.constant 0 : index
    %38 = vector.load %arg1[%c0_26, %c2, %c0_27] : memref<2x18x128xbf16, #tpu.memory_space<vmem>>, vector<2x16x128xbf16>
    %39 = arith.extf %38 : vector<2x16x128xbf16> to vector<2x16x128xf32>
    %c0_28 = arith.constant 0 : index
    %c0_29 = arith.constant 0 : index
    %c0_30 = arith.constant 0 : index
    %40 = vector.load %arg2[%c0_28, %c0_29, %c0_30] : memref<1x1x128xf32, #tpu.memory_space<vmem>>, vector<1x1x128xf32>
    %41 = vector.broadcast %40 : vector<1x1x128xf32> to vector<2x16x128xf32>
    %42 = arith.mulf %39, %41 : vector<2x16x128xf32>
    %c0_31 = arith.constant 0 : index
    %c0_32 = arith.constant 0 : index
    %c0_33 = arith.constant 0 : index
    %43 = vector.load %arg3[%c0_31, %c0_32, %c0_33] : memref<1x1x128xf32, #tpu.memory_space<vmem>>, vector<1x1x128xf32>
    %44 = vector.broadcast %43 : vector<1x1x128xf32> to vector<2x16x128xf32>
    %45 = arith.addf %42, %44 : vector<2x16x128xf32>
    %cst_34 = arith.constant 0.000000e+00 : f32
    %46 = vector.broadcast %cst_34 : f32 to vector<2x16x128xf32>
    %47 = arith.maximumf %45, %46 : vector<2x16x128xf32>
    %48 = tpu.iota {dimensions = array<i32: 1>} : vector<2x16x1xi32>
    %c15_i32 = arith.constant 15 : i32
    %49 = vector.broadcast %c15_i32 : i32 to vector<2x16x1xi32>
    %50 = arith.cmpi eq, %48, %49 : vector<2x16x1xi32>
    %cst_35 = arith.constant 0.000000e+00 : f32
    %51 = vector.shape_cast %50 : vector<2x16x1xi1> to vector<2x16x1xi1>
    %52 = vector.broadcast %51 : vector<2x16x1xi1> to vector<2x16x128xi1>
    %53 = vector.broadcast %cst_35 : f32 to vector<2x16x128xf32>
    %54 = arith.select %52, %53, %47 : vector<2x16x128xi1>, vector<2x16x128xf32>
    %55 = arith.truncf %54 : vector<2x16x128xf32> to vector<2x16x128xbf16>
    %56 = vector.shape_cast %55 : vector<2x16x128xbf16> to vector<32x128xbf16>
    %c2_36 = arith.constant 2 : index
    %c0_37 = arith.constant 0 : index
    %c0_38 = arith.constant 0 : index
    %57 = vector.load %arg4[%c2_36, %c0_37, %c0_38] : memref<3x128x128xbf16, #tpu.memory_space<vmem>>, vector<1x128x128xbf16>
    %58 = vector.shape_cast %57 : vector<1x128x128xbf16> to vector<128x128xbf16>
    %cst_39 = arith.constant dense<0.000000e+00> : vector<32x128xf32>
    %59 = tpu.matmul %56, %58, %cst_39 {dimension_numbers = #tpu.dot_dimension_numbers<[1], [0], [0], [1], [0, 0, 1, 1], [], []>} : vector<32x128xbf16>, vector<128x128xbf16>, vector<32x128xf32> -> vector<32x128xf32>
    %60 = arith.addf %37, %59 : vector<32x128xf32>
    %61 = vector.shape_cast %60 : vector<32x128xf32> to vector<2x16x128xf32>
    %62 = arith.truncf %61 : vector<2x16x128xf32> to vector<2x16x128xbf16>
    %c0_40 = arith.constant 0 : index
    %c0_41 = arith.constant 0 : index
    %c0_42 = arith.constant 0 : index
    %63 = vector.load %arg5[%c0_40, %c0_41, %c0_42] : memref<2x16x128xbf16, #tpu.memory_space<vmem>>, vector<2x16x128xbf16>
    tpu.vector_store %arg5[%c0_40, %c0_41, %c0_42], %62 {strides = array<i32>} : memref<2x16x128xbf16, #tpu.memory_space<vmem>>, vector<2x16x128xbf16>,
    %cst_43 = arith.constant dense<0.000000e+00> : vector<2x128xf32>
    %64 = vector.multi_reduction <add>, %61, %cst_43 [1] : vector<2x16x128xf32> to vector<2x128xf32>
    %65 = vector.shape_cast %64 : vector<2x128xf32> to vector<2x1x128xf32>
    %c0_44 = arith.constant 0 : index
    %c0_45 = arith.constant 0 : index
    %c0_46 = arith.constant 0 : index
    %66 = vector.load %arg6[%c0_44, %c0_45, %c0_46] : memref<2x1x128xf32, #tpu.memory_space<vmem>>, vector<2x1x128xf32>
    tpu.vector_store %arg6[%c0_44, %c0_45, %c0_46], %65 {strides = array<i32>} : memref<2x1x128xf32, #tpu.memory_space<vmem>>, vector<2x1x128xf32>,
    %67 = arith.mulf %61, %61 : vector<2x16x128xf32>
    %cst_47 = arith.constant dense<0.000000e+00> : vector<2x128xf32>
    %68 = vector.multi_reduction <add>, %67, %cst_47 [1] : vector<2x16x128xf32> to vector<2x128xf32>
    %69 = vector.shape_cast %68 : vector<2x128xf32> to vector<2x1x128xf32>
    %c0_48 = arith.constant 0 : index
    %c0_49 = arith.constant 0 : index
    %c0_50 = arith.constant 0 : index
    %70 = vector.load %arg7[%c0_48, %c0_49, %c0_50] : memref<2x1x128xf32, #tpu.memory_space<vmem>>, vector<2x1x128xf32>
    tpu.vector_store %arg7[%c0_48, %c0_49, %c0_50], %69 {strides = array<i32>} : memref<2x1x128xf32, #tpu.memory_space<vmem>>, vector<2x1x128xf32>,
    return
  }
  func.func @transform_0(%arg0: i32) -> (i32, i32, i32) {
    %c0_i32 = arith.constant 0 : i32
    %c0_i32_0 = arith.constant 0 : i32
    %c0_i32_1 = arith.constant 0 : i32
    return %arg0, %c0_i32, %c0_i32_0 : i32, i32, i32
  }
  func.func @transform_1(%arg0: i32) -> (i32, i32, i32) {
    %c0_i32 = arith.constant 0 : i32
    %c0_i32_0 = arith.constant 0 : i32
    %c0_i32_1 = arith.constant 0 : i32
    %c0_i32_2 = arith.constant 0 : i32
    return %c0_i32, %c0_i32_0, %c0_i32_1 : i32, i32, i32
  }
  func.func @transform_2(%arg0: i32) -> (i32, i32, i32) {
    %c0_i32 = arith.constant 0 : i32
    %c0_i32_0 = arith.constant 0 : i32
    %c0_i32_1 = arith.constant 0 : i32
    %c0_i32_2 = arith.constant 0 : i32
    return %c0_i32, %c0_i32_0, %c0_i32_1 : i32, i32, i32
  }
  func.func @transform_3(%arg0: i32) -> (i32, i32, i32) {
    %c0_i32 = arith.constant 0 : i32
    %c0_i32_0 = arith.constant 0 : i32
    %c0_i32_1 = arith.constant 0 : i32
    %c0_i32_2 = arith.constant 0 : i32
    return %c0_i32, %c0_i32_0, %c0_i32_1 : i32, i32, i32
  }
  func.func @transform_4(%arg0: i32) -> (i32, i32, i32) {
    %c0_i32 = arith.constant 0 : i32
    %c0_i32_0 = arith.constant 0 : i32
    %c0_i32_1 = arith.constant 0 : i32
    return %arg0, %c0_i32, %c0_i32_0 : i32, i32, i32
  }
  func.func @transform_5(%arg0: i32) -> (i32, i32, i32) {
    %c0_i32 = arith.constant 0 : i32
    %c0_i32_0 = arith.constant 0 : i32
    %c0_i32_1 = arith.constant 0 : i32
    return %arg0, %c0_i32, %c0_i32_0 : i32, i32, i32
  }
  func.func @transform_6(%arg0: i32) -> (i32, i32, i32) {
    %c0_i32 = arith.constant 0 : i32
    %c0_i32_0 = arith.constant 0 : i32
    %c0_i32_1 = arith.constant 0 : i32
    return %arg0, %c0_i32, %c0_i32_0 : i32, i32, i32
  }
}

module attributes {stable_mosaic.version = 11 : i64} {
  func.func @_tail_kernel(%arg0: i32, %arg1: memref<2x16x128xbf16, #tpu.memory_space<vmem>>, %arg2: memref<2x16x128xf32, #tpu.memory_space<vmem>>, %arg3: memref<1x1x128xf32, #tpu.memory_space<vmem>>, %arg4: memref<1x1x128xf32, #tpu.memory_space<vmem>>, %arg5: memref<2x1x128xf32, #tpu.memory_space<vmem>>, %arg6: memref<1xi32, #tpu.memory_space<smem>>, %arg7: memref<2x16x128xf32, #tpu.memory_space<vmem>>) attributes {dimension_semantics = [#tpu.dimension_semantics<parallel>], iteration_bounds = array<i64: 1>, scalar_prefetch = 0 : i64, scratch_operands = 0 : i64, tpu.core_type = #tpu.core_type<tc>, window_params = [{transform_indices = @transform_0, window_bounds = array<i64: 2, 16, 128>}, {transform_indices = @transform_1, window_bounds = array<i64: 2, 16, 128>}, {pipeline_mode = #tpu.pipeline_mode<synchronous>, transform_indices = @transform_2, window_bounds = array<i64: 1, 1, 128>}, {pipeline_mode = #tpu.pipeline_mode<synchronous>, transform_indices = @transform_3, window_bounds = array<i64: 1, 1, 128>}, {transform_indices = @transform_4, window_bounds = array<i64: 2, 1, 128>}, {transform_indices = @transform_5, window_bounds = array<i64: 1>}, {transform_indices = @transform_6, window_bounds = array<i64: 2, 16, 128>}]} {
    %c0 = arith.constant 0 : index
    %c0_0 = arith.constant 0 : index
    %c0_1 = arith.constant 0 : index
    %0 = vector.load %arg1[%c0, %c0_0, %c0_1] : memref<2x16x128xbf16, #tpu.memory_space<vmem>>, vector<2x16x128xbf16>
    %1 = arith.extf %0 : vector<2x16x128xbf16> to vector<2x16x128xf32>
    %c0_2 = arith.constant 0 : index
    %c0_3 = arith.constant 0 : index
    %c0_4 = arith.constant 0 : index
    %2 = vector.load %arg3[%c0_2, %c0_3, %c0_4] : memref<1x1x128xf32, #tpu.memory_space<vmem>>, vector<1x1x128xf32>
    %3 = vector.broadcast %2 : vector<1x1x128xf32> to vector<2x16x128xf32>
    %4 = arith.mulf %1, %3 : vector<2x16x128xf32>
    %c0_5 = arith.constant 0 : index
    %c0_6 = arith.constant 0 : index
    %c0_7 = arith.constant 0 : index
    %5 = vector.load %arg4[%c0_5, %c0_6, %c0_7] : memref<1x1x128xf32, #tpu.memory_space<vmem>>, vector<1x1x128xf32>
    %6 = vector.broadcast %5 : vector<1x1x128xf32> to vector<2x16x128xf32>
    %7 = arith.addf %4, %6 : vector<2x16x128xf32>
    %c0_8 = arith.constant 0 : index
    %c0_9 = arith.constant 0 : index
    %c0_10 = arith.constant 0 : index
    %8 = vector.load %arg5[%c0_8, %c0_9, %c0_10] : memref<2x1x128xf32, #tpu.memory_space<vmem>>, vector<2x1x128xf32>
    %9 = vector.broadcast %8 : vector<2x1x128xf32> to vector<2x16x128xf32>
    %10 = arith.mulf %7, %9 : vector<2x16x128xf32>
    %c0_11 = arith.constant 0 : index
    %c0_12 = arith.constant 0 : index
    %c0_13 = arith.constant 0 : index
    %11 = vector.load %arg2[%c0_11, %c0_12, %c0_13] : memref<2x16x128xf32, #tpu.memory_space<vmem>>, vector<2x16x128xf32>
    %12 = arith.addf %10, %11 : vector<2x16x128xf32>
    %cst = arith.constant 0.000000e+00 : f32
    %13 = vector.broadcast %cst : f32 to vector<2x16x128xf32>
    %14 = arith.maximumf %12, %13 : vector<2x16x128xf32>
    %15 = tpu.iota {dimensions = array<i32: 0>} : vector<2x16x128xi32>
    %16 = tpu.iota {dimensions = array<i32: 1>} : vector<2x16x128xi32>
    %17 = tpu.iota {dimensions = array<i32: 2>} : vector<2x16x128xi32>
    %c2_i32 = arith.constant 2 : i32
    %18 = arith.muli %arg0, %c2_i32 : i32
    %19 = vector.broadcast %18 : i32 to vector<2x16x128xi32>
    %20 = arith.addi %19, %15 : vector<2x16x128xi32>
    %c16_i32 = arith.constant 16 : i32
    %21 = vector.broadcast %c16_i32 : i32 to vector<2x16x128xi32>
    %22 = arith.muli %20, %21 : vector<2x16x128xi32>
    %23 = arith.addi %22, %16 : vector<2x16x128xi32>
    %c128_i32 = arith.constant 128 : i32
    %24 = vector.broadcast %c128_i32 : i32 to vector<2x16x128xi32>
    %25 = arith.muli %23, %24 : vector<2x16x128xi32>
    %26 = arith.addi %25, %17 : vector<2x16x128xi32>
    %c0_14 = arith.constant 0 : index
    %27 = memref.load %arg6[%c0_14] : memref<1xi32, #tpu.memory_space<smem>>
    %c-1640531535_i32 = arith.constant -1640531535 : i32
    %28 = arith.muli %27, %c-1640531535_i32 : i32
    %29 = vector.broadcast %28 : i32 to vector<2x16x128xi32>
    %30 = arith.addi %26, %29 : vector<2x16x128xi32>
    %c16_i32_15 = arith.constant 16 : i32
    %31 = vector.broadcast %c16_i32_15 : i32 to vector<2x16x128xi32>
    %32 = arith.shrui %30, %31 : vector<2x16x128xi32>
    %33 = arith.xori %30, %32 : vector<2x16x128xi32>
    %c2146121005_i32 = arith.constant 2146121005 : i32
    %34 = vector.broadcast %c2146121005_i32 : i32 to vector<2x16x128xi32>
    %35 = arith.muli %33, %34 : vector<2x16x128xi32>
    %c15_i32 = arith.constant 15 : i32
    %36 = vector.broadcast %c15_i32 : i32 to vector<2x16x128xi32>
    %37 = arith.shrui %35, %36 : vector<2x16x128xi32>
    %38 = arith.xori %35, %37 : vector<2x16x128xi32>
    %c-2073254261_i32 = arith.constant -2073254261 : i32
    %39 = vector.broadcast %c-2073254261_i32 : i32 to vector<2x16x128xi32>
    %40 = arith.muli %38, %39 : vector<2x16x128xi32>
    %c16_i32_16 = arith.constant 16 : i32
    %41 = vector.broadcast %c16_i32_16 : i32 to vector<2x16x128xi32>
    %42 = arith.shrui %40, %41 : vector<2x16x128xi32>
    %43 = arith.xori %40, %42 : vector<2x16x128xi32>
    %c8_i32 = arith.constant 8 : i32
    %44 = vector.broadcast %c8_i32 : i32 to vector<2x16x128xi32>
    %45 = arith.shrui %43, %44 : vector<2x16x128xi32>
    %c11744051_i32 = arith.constant 11744051 : i32
    %46 = vector.broadcast %c11744051_i32 : i32 to vector<2x16x128xi32>
    %47 = arith.cmpi slt, %45, %46 : vector<2x16x128xi32>
    %cst_17 = arith.constant 1.42857146 : f32
    %48 = vector.broadcast %cst_17 : f32 to vector<2x16x128xf32>
    %49 = arith.mulf %14, %48 : vector<2x16x128xf32>
    %cst_18 = arith.constant 0.000000e+00 : f32
    %50 = vector.broadcast %cst_18 : f32 to vector<2x16x128xf32>
    %51 = arith.select %47, %49, %50 : vector<2x16x128xi1>, vector<2x16x128xf32>
    %c0_19 = arith.constant 0 : index
    %c0_20 = arith.constant 0 : index
    %c0_21 = arith.constant 0 : index
    %52 = vector.load %arg7[%c0_19, %c0_20, %c0_21] : memref<2x16x128xf32, #tpu.memory_space<vmem>>, vector<2x16x128xf32>
    tpu.vector_store %arg7[%c0_19, %c0_20, %c0_21], %51 {strides = array<i32>} : memref<2x16x128xf32, #tpu.memory_space<vmem>>, vector<2x16x128xf32>,
    return
  }
  func.func @transform_0(%arg0: i32) -> (i32, i32, i32) {
    %c0_i32 = arith.constant 0 : i32
    %c0_i32_0 = arith.constant 0 : i32
    %c0_i32_1 = arith.constant 0 : i32
    return %arg0, %c0_i32, %c0_i32_0 : i32, i32, i32
  }
  func.func @transform_1(%arg0: i32) -> (i32, i32, i32) {
    %c0_i32 = arith.constant 0 : i32
    %c0_i32_0 = arith.constant 0 : i32
    %c0_i32_1 = arith.constant 0 : i32
    return %arg0, %c0_i32, %c0_i32_0 : i32, i32, i32
  }
  func.func @transform_2(%arg0: i32) -> (i32, i32, i32) {
    %c0_i32 = arith.constant 0 : i32
    %c0_i32_0 = arith.constant 0 : i32
    %c0_i32_1 = arith.constant 0 : i32
    %c0_i32_2 = arith.constant 0 : i32
    return %c0_i32, %c0_i32_0, %c0_i32_1 : i32, i32, i32
  }
  func.func @transform_3(%arg0: i32) -> (i32, i32, i32) {
    %c0_i32 = arith.constant 0 : i32
    %c0_i32_0 = arith.constant 0 : i32
    %c0_i32_1 = arith.constant 0 : i32
    %c0_i32_2 = arith.constant 0 : i32
    return %c0_i32, %c0_i32_0, %c0_i32_1 : i32, i32, i32
  }
  func.func @transform_4(%arg0: i32) -> (i32, i32, i32) {
    %c0_i32 = arith.constant 0 : i32
    %c0_i32_0 = arith.constant 0 : i32
    %c0_i32_1 = arith.constant 0 : i32
    return %arg0, %c0_i32, %c0_i32_0 : i32, i32, i32
  }
  func.func @transform_5(%arg0: i32) -> i32 {
    %c0_i32 = arith.constant 0 : i32
    %c0_i32_0 = arith.constant 0 : i32
    return %c0_i32 : i32
  }
  func.func @transform_6(%arg0: i32) -> (i32, i32, i32) {
    %c0_i32 = arith.constant 0 : i32
    %c0_i32_0 = arith.constant 0 : i32
    %c0_i32_1 = arith.constant 0 : i32
    return %arg0, %c0_i32, %c0_i32_0 : i32, i32, i32
  }
}

</mosaic_0001>

<llo_original>
// kernel: residual_block_forward.3
$region0: #{residual_block_forward.3}
  #allocation0 [shape = 'u32[]', space=smem, size = 0x4, offset = 0x4, fixed_abs, tag = 'smem constant byte address 0x4 - core index']
  #allocation1 [shape = 'u32[72,128]{1,0:T(1,128)}', space=vmem, size = 0x9000, scoped, tag = 'internal scratch']
  %s0 = inlined_call_operand.vmem [shape: f32[2,18,128], index: 0, kind: input, shape index: {}]
  %s1 = inlined_call_operand.vmem [shape: bf16[3,128,128], index: 1, kind: input, shape index: {}]
  %s2 = inlined_call_operand.vmem [shape: bf16[2,16,128], index: 2, kind: output, shape index: {0}]
  %s3 = inlined_call_operand.vmem [shape: f32[2,1,128], index: 3, kind: output, shape index: {1}]
  %s4 = inlined_call_operand.vmem [shape: f32[2,1,128], index: 4, kind: output, shape index: {2}]
  %5 = xla_tuple %s2, %s3, %s4
  %s6 = sld [smem:[#allocation0]]
  $region34: #{residual_block_forward.3} parent=0
    _
  %s8 = ssub.s32 1, %s6
  %s9 = scalar_select 0, %s8, %s6
  // Predicated region
  $region2: #{residual_block_forward.3} parent=0 // pred_check
    _
  $region3: #{residual_block_forward.3} parent=0 // pred_check_branch
    %11 = sbr.rel (0) target = $region5
  $region4: #{residual_block_forward.3} parent=0 // pred_region
    _
  $region5: #{residual_block_forward.3} parent=0 // pred_fallthru
    _
  // Predicated region
  $region6: #{residual_block_forward.3} parent=0 // pred_check
    _
  $region7: #{residual_block_forward.3} parent=0 // pred_check_branch
    %13 = sbr.rel (0) target = $region9
  $region8: #{residual_block_forward.3} parent=0 // pred_region
    _
  $region9: #{residual_block_forward.3} parent=0 // pred_fallthru
    _
  %v14 = vld [vmem:[%s0] sm:$0xff]
  %v15 = vld [vmem:[%s0 + $0x8] sm:$0xff]
  %v16 = vld [vmem:[%s0 + $0x18] sm:$0xff]
  %v17 = vld [vmem:[%s0 + $0x20] sm:$0xff]
  %v18 = vpack.c.bf16 %v14, %v14
  %v19 = vpack.c.bf16 %v15, %v15
  %v20 = vpack.c.bf16 %v16, %v16
  %v21 = vpack.c.bf16 %v17, %v17
  %v22 = vld [vmem:[%s1] sm:$0xf]
  %v23 = vld [vmem:[%s1 + $0x4] sm:$0xf]
  %v24 = vld [vmem:[%s1 + $0x8] sm:$0xf]
  %v25 = vld [vmem:[%s1 + $0xc] sm:$0xf]
  %v26 = vld [vmem:[%s1 + $0x10] sm:$0xf]
  %v27 = vld [vmem:[%s1 + $0x14] sm:$0xf]
  %v28 = vld [vmem:[%s1 + $0x18] sm:$0xf]
  %v29 = vld [vmem:[%s1 + $0x1c] sm:$0xf]
  %v30 = vld [vmem:[%s1 + $0x20] sm:$0xf]
  %v31 = vld [vmem:[%s1 + $0x24] sm:$0xf]
  %v32 = vld [vmem:[%s1 + $0x28] sm:$0xf]
  %v33 = vld [vmem:[%s1 + $0x2c] sm:$0xf]
  %v34 = vld [vmem:[%s1 + $0x30] sm:$0xf]
  %v35 = vld [vmem:[%s1 + $0x34] sm:$0xf]
  %v36 = vld [vmem:[%s1 + $0x38] sm:$0xf]
  %v37 = vld [vmem:[%s1 + $0x3c] sm:$0xf]
  %v38 = vld [vmem:[%s0 + $0x1] sm:$0xff]
  %v39 = vld [vmem:[%s0 + $0x9] sm:$0xff]
  %v40 = vld [vmem:[%s0 + $0x19] sm:$0xff]
  %v41 = vld [vmem:[%s0 + $0x21] sm:$0xff]
  %v42 = vpack.c.bf16 %v38, %v38
  %v43 = vpack.c.bf16 %v39, %v39
  %v44 = vpack.c.bf16 %v40, %v40
  %v45 = vpack.c.bf16 %v41, %v41
  %s46 = scalar_lea.vmem %s1, 64
  %v47 = vld [vmem:[%s46] sm:$0xf]
  %v48 = vld [vmem:[%s46 + $0x4] sm:$0xf]
  %v49 = vld [vmem:[%s46 + $0x8] sm:$0xf]
  %v50 = vld [vmem:[%s46 + $0xc] sm:$0xf]
  %v51 = vld [vmem:[%s46 + $0x10] sm:$0xf]
  %v52 = vld [vmem:[%s46 + $0x14] sm:$0xf]
  %v53 = vld [vmem:[%s46 + $0x18] sm:$0xf]
  %v54 = vld [vmem:[%s46 + $0x1c] sm:$0xf]
  %v55 = vld [vmem:[%s46 + $0x20] sm:$0xf]
  %v56 = vld [vmem:[%s46 + $0x24] sm:$0xf]
  %v57 = vld [vmem:[%s46 + $0x28] sm:$0xf]
  %v58 = vld [vmem:[%s46 + $0x2c] sm:$0xf]
  %v59 = vld [vmem:[%s46 + $0x30] sm:$0xf]
  %v60 = vld [vmem:[%s46 + $0x34] sm:$0xf]
  %v61 = vld [vmem:[%s46 + $0x38] sm:$0xf]
  %v62 = vld [vmem:[%s46 + $0x3c] sm:$0xf]
  %v67 = vunpack.c.l.b16 %v42
  %v68 = vunpack.c.l.b16 %v43
  %v69 = vunpack.c.l.b16 %v44
  %v70 = vunpack.c.l.b16 %v45
  %v71 = vpack.c.b16 %v68, %v67
  %v72 = vpack.c.b16 %v70, %v69
  %v91 = vunpack.c.l.b16 %v47
  %v92 = vunpack.c.l.b16 %v48
  %v93 = vunpack.c.l.b16 %v49
  %v94 = vunpack.c.l.b16 %v50
  %v95 = vunpack.c.l.b16 %v51
  %v96 = vunpack.c.l.b16 %v52
  %v97 = vunpack.c.l.b16 %v53
  %v98 = vunpack.c.l.b16 %v54
  %v99 = vunpack.c.l.b16 %v55
  %v100 = vunpack.c.l.b16 %v56
  %v101 = vunpack.c.l.b16 %v57
  %v102 = vunpack.c.l.b16 %v58
  %v103 = vunpack.c.l.b16 %v59
  %v104 = vunpack.c.l.b16 %v60
  %v105 = vunpack.c.l.b16 %v61
  %v106 = vunpack.c.l.b16 %v62
  %v107 = vpack.c.b16 %v92, %v91
  %v108 = vpack.c.b16 %v94, %v93
  %v109 = vpack.c.b16 %v96, %v95
  %v110 = vpack.c.b16 %v98, %v97
  %v111 = vpack.c.b16 %v100, %v99
  %v112 = vpack.c.b16 %v102, %v101
  %v113 = vpack.c.b16 %v104, %v103
  %v114 = vpack.c.b16 %v106, %v105
  %123 = vmatpush.bf16.msra.mxu0 %v114
  %124 = vmatpush.bf16.msra.mxu0 %v113
  %125 = vmatpush.bf16.msra.mxu0 %v112
  %126 = vmatpush.bf16.msra.mxu0 %v111
  %127 = vmatpush.bf16.msra.mxu0 %v110
  %128 = vmatpush.bf16.msra.mxu0 %v109
  %129 = vmatpush.bf16.msra.mxu0 %v108
  %130 = vmatpush.bf16.msra.mxu0 %v107
  %131 = vmatmul.bf16.gmra.mxu0 %v71
  %v132 = vpop.f32.mrf.mxu0
  %v133 = vadd.f32 0.0, %v132
  %v134 = vpop.f32.mrf.mxu0
  %v135 = vadd.f32 0.0, %v134
  %136 = vmatmul.bf16.gmra.mxu0 %v72
  %v137 = vpop.f32.mrf.mxu0
  %v138 = vadd.f32 0.0, %v137
  %v139 = vpop.f32.mrf.mxu0
  %v140 = vadd.f32 0.0, %v139
  %141 = vdwg.mxu0
  %v146 = vunpack.c.l.b16 %v18
  %v147 = vunpack.c.l.b16 %v19
  %v148 = vunpack.c.l.b16 %v20
  %v149 = vunpack.c.l.b16 %v21
  %v150 = vpack.c.b16 %v147, %v146
  %v151 = vpack.c.b16 %v149, %v148
  %v170 = vunpack.c.l.b16 %v22
  %v171 = vunpack.c.l.b16 %v23
  %v172 = vunpack.c.l.b16 %v24
  %v173 = vunpack.c.l.b16 %v25
  %v174 = vunpack.c.l.b16 %v26
  %v175 = vunpack.c.l.b16 %v27
  %v176 = vunpack.c.l.b16 %v28
  %v177 = vunpack.c.l.b16 %v29
  %v178 = vunpack.c.l.b16 %v30
  %v179 = vunpack.c.l.b16 %v31
  %v180 = vunpack.c.l.b16 %v32
  %v181 = vunpack.c.l.b16 %v33
  %v182 = vunpack.c.l.b16 %v34
  %v183 = vunpack.c.l.b16 %v35
  %v184 = vunpack.c.l.b16 %v36
  %v185 = vunpack.c.l.b16 %v37
  %v186 = vpack.c.b16 %v171, %v170
  %v187 = vpack.c.b16 %v173, %v172
  %v188 = vpack.c.b16 %v175, %v174
  %v189 = vpack.c.b16 %v177, %v176
  %v190 = vpack.c.b16 %v179, %v178
  %v191 = vpack.c.b16 %v181, %v180
  %v192 = vpack.c.b16 %v183, %v182
  %v193 = vpack.c.b16 %v185, %v184
  %202 = vmatpush.bf16.msra.mxu0 %v193
  %203 = vmatpush.bf16.msra.mxu0 %v192
  %204 = vmatpush.bf16.msra.mxu0 %v191
  %205 = vmatpush.bf16.msra.mxu0 %v190
  %206 = vmatpush.bf16.msra.mxu0 %v189
  %207 = vmatpush.bf16.msra.mxu0 %v188
  %208 = vmatpush.bf16.msra.mxu0 %v187
  %209 = vmatpush.bf16.msra.mxu0 %v186
  %210 = vmatmul.bf16.gmra.mxu0 %v150
  %v211 = vpop.f32.mrf.mxu0
  %v212 = vadd.f32 %v133, %v211
  %v213 = vpop.f32.mrf.mxu0
  %v214 = vadd.f32 %v135, %v213
  %215 = vmatmul.bf16.gmra.mxu0 %v151
  %v216 = vpop.f32.mrf.mxu0
  %v217 = vadd.f32 %v138, %v216
  %v218 = vpop.f32.mrf.mxu0
  %v219 = vadd.f32 %v140, %v218
  %220 = vdwg.mxu0
  %v221 = vld [vmem:[%s0 + $0x2] sm:$0xff]
  %v222 = vld [vmem:[%s0 + $0xa] sm:$0xff]
  %v223 = vld [vmem:[%s0 + $0x1a] sm:$0xff]
  %v224 = vld [vmem:[%s0 + $0x22] sm:$0xff]
  %v225 = vpack.c.bf16 %v221, %v221
  %v226 = vpack.c.bf16 %v222, %v222
  %v227 = vpack.c.bf16 %v223, %v223
  %v228 = vpack.c.bf16 %v224, %v224
  %s229 = scalar_lea.vmem %s1, 128
  %v230 = vld [vmem:[%s229] sm:$0xf]
  %v231 = vld [vmem:[%s229 + $0x4] sm:$0xf]
  %v232 = vld [vmem:[%s229 + $0x8] sm:$0xf]
  %v233 = vld [vmem:[%s229 + $0xc] sm:$0xf]
  %v234 = vld [vmem:[%s229 + $0x10] sm:$0xf]
  %v235 = vld [vmem:[%s229 + $0x14] sm:$0xf]
  %v236 = vld [vmem:[%s229 + $0x18] sm:$0xf]
  %v237 = vld [vmem:[%s229 + $0x1c] sm:$0xf]
  %v238 = vld [vmem:[%s229 + $0x20] sm:$0xf]
  %v239 = vld [vmem:[%s229 + $0x24] sm:$0xf]
  %v240 = vld [vmem:[%s229 + $0x28] sm:$0xf]
  %v241 = vld [vmem:[%s229 + $0x2c] sm:$0xf]
  %v242 = vld [vmem:[%s229 + $0x30] sm:$0xf]
  %v243 = vld [vmem:[%s229 + $0x34] sm:$0xf]
  %v244 = vld [vmem:[%s229 + $0x38] sm:$0xf]
  %v245 = vld [vmem:[%s229 + $0x3c] sm:$0xf]
  %v250 = vunpack.c.l.b16 %v225
  %v251 = vunpack.c.l.b16 %v226
  %v252 = vunpack.c.l.b16 %v227
  %v253 = vunpack.c.l.b16 %v228
  %v254 = vpack.c.b16 %v251, %v250
  %v255 = vpack.c.b16 %v253, %v252
  %v274 = vunpack.c.l.b16 %v230
  %v275 = vunpack.c.l.b16 %v231
  %v276 = vunpack.c.l.b16 %v232
  %v277 = vunpack.c.l.b16 %v233
  %v278 = vunpack.c.l.b16 %v234
  %v279 = vunpack.c.l.b16 %v235
  %v280 = vunpack.c.l.b16 %v236
  %v281 = vunpack.c.l.b16 %v237
  %v282 = vunpack.c.l.b16 %v238
  %v283 = vunpack.c.l.b16 %v239
  %v284 = vunpack.c.l.b16 %v240
  %v285 = vunpack.c.l.b16 %v241
  %v286 = vunpack.c.l.b16 %v242
  %v287 = vunpack.c.l.b16 %v243
  %v288 = vunpack.c.l.b16 %v244
  %v289 = vunpack.c.l.b16 %v245
  %v290 = vpack.c.b16 %v275, %v274
  %v291 = vpack.c.b16 %v277, %v276
  %v292 = vpack.c.b16 %v279, %v278
  %v293 = vpack.c.b16 %v281, %v280
  %v294 = vpack.c.b16 %v283, %v282
  %v295 = vpack.c.b16 %v285, %v284
  %v296 = vpack.c.b16 %v287, %v286
  %v297 = vpack.c.b16 %v289, %v288
  %306 = vmatpush.bf16.msra.mxu0 %v297
  %307 = vmatpush.bf16.msra.mxu0 %v296
  %308 = vmatpush.bf16.msra.mxu0 %v295
  %309 = vmatpush.bf16.msra.mxu0 %v294
  %310 = vmatpush.bf16.msra.mxu0 %v293
  %311 = vmatpush.bf16.msra.mxu0 %v292
  %312 = vmatpush.bf16.msra.mxu0 %v291
  %313 = vmatpush.bf16.msra.mxu0 %v290
  %314 = vmatmul.bf16.gmra.mxu0 %v254
  %v315 = vpop.f32.mrf.mxu0
  %v316 = vadd.f32 0.0, %v315
  %v317 = vpop.f32.mrf.mxu0
  %v318 = vadd.f32 0.0, %v317
  %319 = vmatmul.bf16.gmra.mxu0 %v255
  %v320 = vpop.f32.mrf.mxu0
  %v321 = vadd.f32 0.0, %v320
  %v322 = vpop.f32.mrf.mxu0
  %v323 = vadd.f32 0.0, %v322
  %324 = vdwg.mxu0
  %v325 = vadd.f32 %v212, %v316
  %v326 = vadd.f32 %v214, %v318
  %v327 = vadd.f32 %v217, %v321
  %v328 = vadd.f32 %v219, %v323
  %v329 = vpack.c.bf16 %v325, %v325
  %v330 = vpack.c.bf16 %v326, %v326
  %v331 = vpack.c.bf16 %v327, %v327
  %v332 = vpack.c.bf16 %v328, %v328
  %333 = vst [vmem:[%s2] sm:$0xf] %v329
  %334 = vst [vmem:[%s2 + $0x4] sm:$0xf] %v330
  %335 = vst [vmem:[%s2 + $0x8] sm:$0xf] %v331
  %336 = vst [vmem:[%s2 + $0xc] sm:$0xf] %v332
  %v337 = vadd.f32 %v325, %v326
  %v338 = vrot.slane %v337, 4
  %v339 = vadd.f32 %v337, %v338
  %v340 = vrot.slane %v339, 2
  %v341 = vadd.f32 %v339, %v340
  %v342 = vrot.slane %v341, 1
  %v343 = vadd.f32 %v341, %v342
  %v344 = vadd.f32 %v327, %v328
  %v345 = vrot.slane %v344, 4
  %v346 = vadd.f32 %v344, %v345
  %v347 = vrot.slane %v346, 2
  %v348 = vadd.f32 %v346, %v347
  %v349 = vrot.slane %v348, 1
  %v350 = vadd.f32 %v348, %v349
  %351 = vst [vmem:[%s3] sm:$0x1] %v343
  %352 = vst [vmem:[%s3 + $0x1] sm:$0x1] %v350
  %v353 = vmul.f32 %v325, %v325
  %v354 = vmul.f32 %v326, %v326
  %v355 = vmul.f32 %v327, %v327
  %v356 = vmul.f32 %v328, %v328
  %v357 = vadd.f32 %v353, %v354
  %v358 = vrot.slane %v357, 4
  %v359 = vadd.f32 %v357, %v358
  %v360 = vrot.slane %v359, 2
  %v361 = vadd.f32 %v359, %v360
  %v362 = vrot.slane %v361, 1
  %v363 = vadd.f32 %v361, %v362
  %v364 = vadd.f32 %v355, %v356
  %v365 = vrot.slane %v364, 4
  %v366 = vadd.f32 %v364, %v365
  %v367 = vrot.slane %v366, 2
  %v368 = vadd.f32 %v366, %v367
  %v369 = vrot.slane %v368, 1
  %v370 = vadd.f32 %v368, %v369
  %371 = vst [vmem:[%s4] sm:$0x1] %v363
  %372 = vst [vmem:[%s4 + $0x1] sm:$0x1] %v370
  // Predicated region
  $region10: #{residual_block_forward.3} parent=0 // pred_check
    _
  $region11: #{residual_block_forward.3} parent=0 // pred_check_branch
    %374 = sbr.rel (0) target = $region13
  $region12: #{residual_block_forward.3} parent=0 // pred_region
    _
  $region13: #{residual_block_forward.3} parent=0 // pred_fallthru
    _
  // Predicated region
  $region14: #{residual_block_forward.3} parent=0 // pred_check
    _
  $region15: #{residual_block_forward.3} parent=0 // pred_check_branch
    %376 = sbr.rel (0) target = $region17
  $region16: #{residual_block_forward.3} parent=0 // pred_region
    _
  $region17: #{residual_block_forward.3} parent=0 // pred_fallthru
    _
  // Predicated region
  $region18: #{residual_block_forward.3} parent=0 // pred_check
    _
  $region19: #{residual_block_forward.3} parent=0 // pred_check_branch
    %378 = sbr.rel (0) target = $region21
  $region20: #{residual_block_forward.3} parent=0 // pred_region
    _
  $region21: #{residual_block_forward.3} parent=0 // pred_fallthru
    _
  // Predicated region
  $region22: #{residual_block_forward.3} parent=0 // pred_check
    _
  $region23: #{residual_block_forward.3} parent=0 // pred_check_branch
    %380 = sbr.rel (0) target = $region25
  $region24: #{residual_block_forward.3} parent=0 // pred_region
    _
  $region25: #{residual_block_forward.3} parent=0 // pred_fallthru
    _
  // Predicated region
  $region26: #{residual_block_forward.3} parent=0 // pred_check
    _
  $region27: #{residual_block_forward.3} parent=0 // pred_check_branch
    %382 = sbr.rel (0) target = $region29
  $region28: #{residual_block_forward.3} parent=0 // pred_region
    _
  $region29: #{residual_block_forward.3} parent=0 // pred_fallthru
    _
  // Predicated region
  $region30: #{residual_block_forward.3} parent=0 // pred_check
    _
  $region31: #{residual_block_forward.3} parent=0 // pred_check_branch
    %384 = sbr.rel (0) target = $region33
  $region32: #{residual_block_forward.3} parent=0 // pred_region
    _
  $region33: #{residual_block_forward.3} parent=0 // pred_fallthru
    _

// kernel: tile.28
$region0: #{tile.28}
  #allocation0 [shape = 's32[1]{0}', space=sflag, size = 0x4, scoped, tag = 'scoped memory for tile.28']
  %s0 = inlined_call_operand.vmem [shape: f32[8], index: 0, kind: input, shape index: {}]
  %s1 = inlined_call_operand.vmem [shape: f32[16,8], index: 1, kind: output, shape index: {}]
  // Predicated region
  $region2: #{tile.28} parent=0 // pred_check
    _
  $region3: #{tile.28} parent=0 // pred_check_branch
    %3 = sbr.rel (0) target = $region5
  $region4: #{tile.28} parent=0 // pred_region
    _
  $region5: #{tile.28} parent=0 // pred_fallthru
    _
  %v4 = vld [vmem:[%s0] ss:$0 sm:$0xff]
  %5 = vst [vmem:[%s1] sm:$0xff] %v4
  %s6 = scalar_lea.vmem %s1, 8
  %7 = vst [vmem:[%s6] sm:$0xff] %v4

// kernel: tile.29
$region0: #{tile.29}
  %s0 = inlined_call_operand.vmem [shape: f32[16,8], index: 0, kind: input, shape index: {}]
  %s1 = inlined_call_operand.vmem [shape: f32[1,1,128], index: 1, kind: output, shape index: {}]
  $region1: #{tile.29} parent=0
    #allocation0 [shape = 'u8[4096]{0}', space=vmem, size = 0x1000, scoped, tag = 'scoped mem for output reshape']
    %v2 = vld [vmem:[%s0] sm:$0x1]
    %vm3 = vcmask 64512
    %4 = vst.msk [vmem:[#allocation0] sm:$0x1] %vm3, %v2
    %s5 = scalar_lea.vmem %s0, 15
    %v6 = vld [vmem:[%s5] sm:$0x1]
    %7 = vrot.lane.b32.xlu0 %v6, 120
    %v8 = vpop.permute.xlu0 %7
    %vm9 = vcmask 1048512
    %10 = vst.msk [vmem:[#allocation0] sm:$0x1] %vm9, %v8
    %s11 = scalar_lea.vmem %s0, 14
    %v12 = vld [vmem:[%s11] sm:$0x1]
    %13 = vrot.lane.b32.xlu0 %v12, 112
    %v14 = vpop.permute.xlu0 %13
    %vm15 = vcmask 982912
    %16 = vst.msk [vmem:[#allocation0] sm:$0x1] %vm15, %v14
    %s17 = scalar_lea.vmem %s0, 13
    %v18 = vld [vmem:[%s17] sm:$0x1]
    %19 = vrot.lane.b32.xlu0 %v18, 104
    %v20 = vpop.permute.xlu0 %19
    %vm21 = vcmask 917312
    %22 = vst.msk [vmem:[#allocation0] sm:$0x1] %vm21, %v20
    %s23 = scalar_lea.vmem %s0, 12
    %v24 = vld [vmem:[%s23] sm:$0x1]
    %25 = vrot.lane.b32.xlu0 %v24, 96
    %v26 = vpop.permute.xlu0 %25
    %vm27 = vcmask 851712
    %28 = vst.msk [vmem:[#allocation0] sm:$0x1] %vm27, %v26
    %s29 = scalar_lea.vmem %s0, 11
    %v30 = vld [vmem:[%s29] sm:$0x1]
    %31 = vrot.lane.b32.xlu0 %v30, 88
    %v32 = vpop.permute.xlu0 %31
    %vm33 = vcmask 786112
    %34 = vst.msk [vmem:[#allocation0] sm:$0x1] %vm33, %v32
    %s35 = scalar_lea.vmem %s0, 10
    %v36 = vld [vmem:[%s35] sm:$0x1]
    %37 = vrot.lane.b32.xlu0 %v36, 80
    %v38 = vpop.permute.xlu0 %37
    %vm39 = vcmask 720512
    %40 = vst.msk [vmem:[#allocation0] sm:$0x1] %vm39, %v38
    %s41 = scalar_lea.vmem %s0, 9
    %v42 = vld [vmem:[%s41] sm:$0x1]
    %43 = vrot.lane.b32.xlu0 %v42, 72
    %v44 = vpop.permute.xlu0 %43
    %vm45 = vcmask 654912
    %46 = vst.msk [vmem:[#allocation0] sm:$0x1] %vm45, %v44
    %s47 = scalar_lea.vmem %s0, 8
    %v48 = vld [vmem:[%s47] sm:$0x1]
    %49 = vrot.lane.b32.xlu0 %v48, 64
    %v50 = vpop.permute.xlu0 %49
    %vm51 = vcmask 589312
    %52 = vst.msk [vmem:[#allocation0] sm:$0x1] %vm51, %v50
    %s53 = scalar_lea.vmem %s0, 7
    %v54 = vld [vmem:[%s53] sm:$0x1]
    %55 = vrot.lane.b32.xlu0 %v54, 56
    %v56 = vpop.permute.xlu0 %55
    %vm57 = vcmask 523712
    %58 = vst.msk [vmem:[#allocation0] sm:$0x1] %vm57, %v56
    %s59 = scalar_lea.vmem %s0, 6
    %v60 = vld [vmem:[%s59] sm:$0x1]
    %61 = vrot.lane.b32.xlu0 %v60, 48
    %v62 = vpop.permute.xlu0 %61
    %vm63 = vcmask 458112
    %64 = vst.msk [vmem:[#allocation0] sm:$0x1] %vm63, %v62
    %s65 = scalar_lea.vmem %s0, 5
    %v66 = vld [vmem:[%s65] sm:$0x1]
    %67 = vrot.lane.b32.xlu0 %v66, 40
    %v68 = vpop.permute.xlu0 %67
    %vm69 = vcmask 392512
    %70 = vst.msk [vmem:[#allocation0] sm:$0x1] %vm69, %v68
    %s71 = scalar_lea.vmem %s0, 4
    %v72 = vld [vmem:[%s71] sm:$0x1]
    %73 = vrot.lane.b32.xlu0 %v72, 32
    %v74 = vpop.permute.xlu0 %73
    %vm75 = vcmask 326912
    %76 = vst.msk [vmem:[#allocation0] sm:$0x1] %vm75, %v74
    %s77 = scalar_lea.vmem %s0, 3
    %v78 = vld [vmem:[%s77] sm:$0x1]
    %79 = vrot.lane.b32.xlu0 %v78, 24
    %v80 = vpop.permute.xlu0 %79
    %vm81 = vcmask 261312
    %82 = vst.msk [vmem:[#allocation0] sm:$0x1] %vm81, %v80
    %s83 = scalar_lea.vmem %s0, 2
    %v84 = vld [vmem:[%s83] sm:$0x1]
    %85 = vrot.lane.b32.xlu0 %v84, 16
    %v86 = vpop.permute.xlu0 %85
    %vm87 = vcmask 195712
    %88 = vst.msk [vmem:[#allocation0] sm:$0x1] %vm87, %v86
    %s89 = scalar_lea.vmem %s0, 1
    %v90 = vld [vmem:[%s89] sm:$0x1]
    %91 = vrot.lane.b32.xlu0 %v90, 8
    %v92 = vpop.permute.xlu0 %91
    %vm93 = vcmask 130112
    %94 = vst.msk [vmem:[#allocation0] sm:$0x1] %vm93, %v92
    %s96 = ssub.s32 2, 1
    %v97 = vld [vmem:[#allocation0] sm:%s96]
    %s99 = ssub.s32 2, 1
    %100 = vst [vmem:[%s1] sm:%s99] %v97

// kernel: residual_block_forward.4
$region0: #{residual_block_forward.4}
  #allocation0 [shape = 'u32[]', space=smem, size = 0x4, offset = 0x4, fixed_abs, tag = 'smem constant byte address 0x4 - core index']
  #allocation1 [shape = 'u32[72,128]{1,0:T(1,128)}', space=vmem, size = 0x9000, scoped, tag = 'internal scratch']
  %s0 = inlined_call_operand.vmem [shape: bf16[2,18,128], index: 0, kind: input, shape index: {}]
  %s1 = inlined_call_operand.vmem [shape: f32[1,1,128], index: 1, kind: input, shape index: {}]
  %s2 = inlined_call_operand.vmem [shape: f32[1,1,128], index: 2, kind: input, shape index: {}]
  %s3 = inlined_call_operand.vmem [shape: bf16[3,128,128], index: 3, kind: input, shape index: {}]
  %s4 = inlined_call_operand.vmem [shape: bf16[2,16,128], index: 4, kind: output, shape index: {0}]
  %s5 = inlined_call_operand.vmem [shape: f32[2,1,128], index: 5, kind: output, shape index: {1}]
  %s6 = inlined_call_operand.vmem [shape: f32[2,1,128], index: 6, kind: output, shape index: {2}]
  %7 = xla_tuple %s4, %s5, %s6
  %s8 = sld [smem:[#allocation0]]
  $region42: #{residual_block_forward.4} parent=0
    _
  %s10 = ssub.s32 1, %s8
  %s11 = scalar_select 0, %s10, %s8
  // Predicated region
  $region2: #{residual_block_forward.4} parent=0 // pred_check
    _
  $region3: #{residual_block_forward.4} parent=0 // pred_check_branch
    %13 = sbr.rel (0) target = $region5
  $region4: #{residual_block_forward.4} parent=0 // pred_region
    _
  $region5: #{residual_block_forward.4} parent=0 // pred_fallthru
    _
  // Predicated region
  $region6: #{residual_block_forward.4} parent=0 // pred_check
    _
  $region7: #{residual_block_forward.4} parent=0 // pred_check_branch
    %15 = sbr.rel (0) target = $region9
  $region8: #{residual_block_forward.4} parent=0 // pred_region
    _
  $region9: #{residual_block_forward.4} parent=0 // pred_fallthru
    _
  // Predicated region
  $region10: #{residual_block_forward.4} parent=0 // pred_check
    _
  $region11: #{residual_block_forward.4} parent=0 // pred_check_branch
    %17 = sbr.rel (0) target = $region13
  $region12: #{residual_block_forward.4} parent=0 // pred_region
    _
  $region13: #{residual_block_forward.4} parent=0 // pred_fallthru
    _
  // Predicated region
  $region14: #{residual_block_forward.4} parent=0 // pred_check
    _
  $region15: #{residual_block_forward.4} parent=0 // pred_check_branch
    %19 = sbr.rel (0) target = $region17
  $region16: #{residual_block_forward.4} parent=0 // pred_region
    _
  $region17: #{residual_block_forward.4} parent=0 // pred_fallthru
    _
  %v20 = vld [vmem:[%s0] sm:$0xf]
  %v21 = vld [vmem:[%s0 + $0x4] sm:$0xf]
  %v22 = vld [vmem:[%s0 + $0xc] sm:$0xf]
  %v23 = vld [vmem:[%s0 + $0x10] sm:$0xf]
  %v24 = vunpack.c.l.bf16 %v20
  %v25 = vunpack.c.l.bf16 %v21
  %v26 = vunpack.c.l.bf16 %v22
  %v27 = vunpack.c.l.bf16 %v23
  %v28 = vld [vmem:[%s1] sm:$0x1]
  %v30 = vperm.slane %v28, 0
  %v32 = vmul.f32 %v24, %v30
  %v33 = vmul.f32 %v25, %v30
  %v34 = vmul.f32 %v26, %v30
  %v35 = vmul.f32 %v27, %v30
  %v36 = vld [vmem:[%s2] sm:$0x1]
  %v38 = vperm.slane %v36, 0
  %v40 = vadd.f32 %v32, %v38
  %v41 = vadd.f32 %v33, %v38
  %v42 = vadd.f32 %v34, %v38
  %v43 = vadd.f32 %v35, %v38
  %v44 = vmax.f32 %v40, 0.0
  %v45 = vmax.f32 %v41, 0.0
  %v46 = vmax.f32 %v42, 0.0
  %v47 = vmax.f32 %v43, 0.0
  %v48 = vlaneseq
  %v49 = vshrl.u32 %v48, 7
  %v50 = vadd.s32 %v49, 8
  %vm51 = vcmp.eq.s32.totalorder %v49, 0
  %vm52 = vcmp.eq.s32.totalorder %v50, 0
  %v53 = vsel %vm51, 1, 0
  %v54 = vsel %vm52, 1, 0
  %vm55 = vcmp.eq.s32.totalorder %v53, 1
  %vm56 = vcmp.eq.s32.totalorder %v54, 1
  %v57 = vsel %vm55, 0.0, %v44
  %v58 = vsel %vm56, 0.0, %v45
  %v59 = vsel %vm55, 0.0, %v46
  %v60 = vsel %vm56, 0.0, %v47
  %v61 = vpack.c.bf16 %v57, %v57
  %v62 = vpack.c.bf16 %v58, %v58
  %v63 = vpack.c.bf16 %v59, %v59
  %v64 = vpack.c.bf16 %v60, %v60
  %v65 = vld [vmem:[%s3] sm:$0xf]
  %v66 = vld [vmem:[%s3 + $0x4] sm:$0xf]
  %v67 = vld [vmem:[%s3 + $0x8] sm:$0xf]
  %v68 = vld [vmem:[%s3 + $0xc] sm:$0xf]
  %v69 = vld [vmem:[%s3 + $0x10] sm:$0xf]
  %v70 = vld [vmem:[%s3 + $0x14] sm:$0xf]
  %v71 = vld [vmem:[%s3 + $0x18] sm:$0xf]
  %v72 = vld [vmem:[%s3 + $0x1c] sm:$0xf]
  %v73 = vld [vmem:[%s3 + $0x20] sm:$0xf]
  %v74 = vld [vmem:[%s3 + $0x24] sm:$0xf]
  %v75 = vld [vmem:[%s3 + $0x28] sm:$0xf]
  %v76 = vld [vmem:[%s3 + $0x2c] sm:$0xf]
  %v77 = vld [vmem:[%s3 + $0x30] sm:$0xf]
  %v78 = vld [vmem:[%s3 + $0x34] sm:$0xf]
  %v79 = vld [vmem:[%s3 + $0x38] sm:$0xf]
  %v80 = vld [vmem:[%s3 + $0x3c] sm:$0xf]
  %v81 = vld [vmem:[%s0] sm:$0xf]
  %v82 = vld [vmem:[%s0 + $0x4] sm:$0xf]
  %v83 = vld [vmem:[%s0 + $0x8] sm:$0x1]
  %v84 = vld [vmem:[%s0 + $0xc] sm:$0xf]
  %v85 = vld [vmem:[%s0 + $0x10] sm:$0xf]
  %v86 = vld [vmem:[%s0 + $0x14] sm:$0x1]
  %v87 = vunpack.c.l.bf16 %v81
  %v88 = vunpack.c.l.bf16 %v82
  %v89 = vunpack.c.l.bf16 %v83
  %v90 = vunpack.c.l.bf16 %v84
  %v91 = vunpack.c.l.bf16 %v85
  %v92 = vunpack.c.l.bf16 %v86
  %v93 = vmul.f32 %v87, %v30
  %v94 = vmul.f32 %v88, %v30
  %v95 = vmul.f32 %v89, %v30
  %v96 = vmul.f32 %v90, %v30
  %v97 = vmul.f32 %v91, %v30
  %v98 = vmul.f32 %v92, %v30
  %v99 = vadd.f32 %v93, %v38
  %v100 = vadd.f32 %v94, %v38
  %v101 = vadd.f32 %v95, %v38
  %v102 = vadd.f32 %v96, %v38
  %v103 = vadd.f32 %v97, %v38
  %v104 = vadd.f32 %v98, %v38
  %v105 = vmax.f32 %v99, 0.0
  %v106 = vmax.f32 %v100, 0.0
  %v107 = vmax.f32 %v101, 0.0
  %v108 = vmax.f32 %v102, 0.0
  %v109 = vmax.f32 %v103, 0.0
  %v110 = vmax.f32 %v104, 0.0
  %v111 = vpack.c.bf16 %v105, %v105
  %v112 = vpack.c.bf16 %v106, %v106
  %v113 = vpack.c.bf16 %v107, %v107
  %v114 = vpack.c.bf16 %v108, %v108
  %v115 = vpack.c.bf16 %v109, %v109
  %v116 = vpack.c.bf16 %v110, %v110
  %vm117 = vsmask.f32 3328
  %vm118 = vsmask.f32 7440
  %vm119 = vmor %vm117, %vm118
  %v121 = vshrl.u32 %v111, 16
  %v123 = vrot.slane %v121, 4
  %v124 = vshll.u32 %v111, 16
  %v126 = vrot.slane %v124, 5
  %v127 = vor.u32 %v123, %v126
  %v128 = vrot.slane %v127, 4
  %v130 = vshll.u32 %v112, 16
  %v132 = vrot.slane %v130, 5
  %v133 = vsel %vm119, %v128, %v132
  %v134 = vshrl.u32 %v112, 16
  %v136 = vrot.slane %v134, 4
  %v137 = vor.u32 %v136, %v132
  %v138 = vrot.slane %v137, 4
  %v140 = vshll.u32 %v113, 16
  %v142 = vrot.slane %v140, 5
  %v143 = vsel %vm119, %v138, %v142
  %v145 = vshrl.u32 %v114, 16
  %v147 = vrot.slane %v145, 4
  %v148 = vshll.u32 %v114, 16
  %v150 = vrot.slane %v148, 5
  %v151 = vor.u32 %v147, %v150
  %v152 = vrot.slane %v151, 4
  %v154 = vshll.u32 %v115, 16
  %v156 = vrot.slane %v154, 5
  %v157 = vsel %vm119, %v152, %v156
  %v158 = vshrl.u32 %v115, 16
  %v160 = vrot.slane %v158, 4
  %v161 = vor.u32 %v160, %v156
  %v162 = vrot.slane %v161, 4
  %v164 = vshll.u32 %v116, 16
  %v166 = vrot.slane %v164, 5
  %v167 = vsel %vm119, %v162, %v166
  %s168 = scalar_lea.vmem %s3, 64
  %v169 = vld [vmem:[%s168] sm:$0xf]
  %v170 = vld [vmem:[%s168 + $0x4] sm:$0xf]
  %v171 = vld [vmem:[%s168 + $0x8] sm:$0xf]
  %v172 = vld [vmem:[%s168 + $0xc] sm:$0xf]
  %v173 = vld [vmem:[%s168 + $0x10] sm:$0xf]
  %v174 = vld [vmem:[%s168 + $0x14] sm:$0xf]
  %v175 = vld [vmem:[%s168 + $0x18] sm:$0xf]
  %v176 = vld [vmem:[%s168 + $0x1c] sm:$0xf]
  %v177 = vld [vmem:[%s168 + $0x20] sm:$0xf]
  %v178 = vld [vmem:[%s168 + $0x24] sm:$0xf]
  %v179 = vld [vmem:[%s168 + $0x28] sm:$0xf]
  %v180 = vld [vmem:[%s168 + $0x2c] sm:$0xf]
  %v181 = vld [vmem:[%s168 + $0x30] sm:$0xf]
  %v182 = vld [vmem:[%s168 + $0x34] sm:$0xf]
  %v183 = vld [vmem:[%s168 + $0x38] sm:$0xf]
  %v184 = vld [vmem:[%s168 + $0x3c] sm:$0xf]
  %v185 = vunpack.c.l.b16 %v133
  %v186 = vunpack.c.l.b16 %v143
  %v187 = vunpack.c.l.b16 %v157
  %v188 = vunpack.c.l.b16 %v167
  %v189 = vpack.c.b16 %v186, %v185
  %v190 = vpack.c.b16 %v188, %v187
  %v209 = vunpack.c.l.b16 %v169
  %v210 = vunpack.c.l.b16 %v170
  %v211 = vunpack.c.l.b16 %v171
  %v212 = vunpack.c.l.b16 %v172
  %v213 = vunpack.c.l.b16 %v173
  %v214 = vunpack.c.l.b16 %v174
  %v215 = vunpack.c.l.b16 %v175
  %v216 = vunpack.c.l.b16 %v176
  %v217 = vunpack.c.l.b16 %v177
  %v218 = vunpack.c.l.b16 %v178
  %v219 = vunpack.c.l.b16 %v179
  %v220 = vunpack.c.l.b16 %v180
  %v221 = vunpack.c.l.b16 %v181
  %v222 = vunpack.c.l.b16 %v182
  %v223 = vunpack.c.l.b16 %v183
  %v224 = vunpack.c.l.b16 %v184
  %v225 = vpack.c.b16 %v210, %v209
  %v226 = vpack.c.b16 %v212, %v211
  %v227 = vpack.c.b16 %v214, %v213
  %v228 = vpack.c.b16 %v216, %v215
  %v229 = vpack.c.b16 %v218, %v217
  %v230 = vpack.c.b16 %v220, %v219
  %v231 = vpack.c.b16 %v222, %v221
  %v232 = vpack.c.b16 %v224, %v223
  %241 = vmatpush.bf16.msra.mxu0 %v232
  %242 = vmatpush.bf16.msra.mxu0 %v231
  %243 = vmatpush.bf16.msra.mxu0 %v230
  %244 = vmatpush.bf16.msra.mxu0 %v229
  %245 = vmatpush.bf16.msra.mxu0 %v228
  %246 = vmatpush.bf16.msra.mxu0 %v227
  %247 = vmatpush.bf16.msra.mxu0 %v226
  %248 = vmatpush.bf16.msra.mxu0 %v225
  %249 = vmatmul.bf16.gmra.mxu0 %v189
  %v250 = vpop.f32.mrf.mxu0
  %v251 = vadd.f32 0.0, %v250
  %v252 = vpop.f32.mrf.mxu0
  %v253 = vadd.f32 0.0, %v252
  %254 = vmatmul.bf16.gmra.mxu0 %v190
  %v255 = vpop.f32.mrf.mxu0
  %v256 = vadd.f32 0.0, %v255
  %v257 = vpop.f32.mrf.mxu0
  %v258 = vadd.f32 0.0, %v257
  %259 = vdwg.mxu0
  %v264 = vunpack.c.l.b16 %v61
  %v265 = vunpack.c.l.b16 %v62
  %v266 = vunpack.c.l.b16 %v63
  %v267 = vunpack.c.l.b16 %v64
  %v268 = vpack.c.b16 %v265, %v264
  %v269 = vpack.c.b16 %v267, %v266
  %v288 = vunpack.c.l.b16 %v65
  %v289 = vunpack.c.l.b16 %v66
  %v290 = vunpack.c.l.b16 %v67
  %v291 = vunpack.c.l.b16 %v68
  %v292 = vunpack.c.l.b16 %v69
  %v293 = vunpack.c.l.b16 %v70
  %v294 = vunpack.c.l.b16 %v71
  %v295 = vunpack.c.l.b16 %v72
  %v296 = vunpack.c.l.b16 %v73
  %v297 = vunpack.c.l.b16 %v74
  %v298 = vunpack.c.l.b16 %v75
  %v299 = vunpack.c.l.b16 %v76
  %v300 = vunpack.c.l.b16 %v77
  %v301 = vunpack.c.l.b16 %v78
  %v302 = vunpack.c.l.b16 %v79
  %v303 = vunpack.c.l.b16 %v80
  %v304 = vpack.c.b16 %v289, %v288
  %v305 = vpack.c.b16 %v291, %v290
  %v306 = vpack.c.b16 %v293, %v292
  %v307 = vpack.c.b16 %v295, %v294
  %v308 = vpack.c.b16 %v297, %v296
  %v309 = vpack.c.b16 %v299, %v298
  %v310 = vpack.c.b16 %v301, %v300
  %v311 = vpack.c.b16 %v303, %v302
  %320 = vmatpush.bf16.msra.mxu0 %v311
  %321 = vmatpush.bf16.msra.mxu0 %v310
  %322 = vmatpush.bf16.msra.mxu0 %v309
  %323 = vmatpush.bf16.msra.mxu0 %v308
  %324 = vmatpush.bf16.msra.mxu0 %v307
  %325 = vmatpush.bf16.msra.mxu0 %v306
  %326 = vmatpush.bf16.msra.mxu0 %v305
  %327 = vmatpush.bf16.msra.mxu0 %v304
  %328 = vmatmul.bf16.gmra.mxu0 %v268
  %v329 = vpop.f32.mrf.mxu0
  %v330 = vadd.f32 %v251, %v329
  %v331 = vpop.f32.mrf.mxu0
  %v332 = vadd.f32 %v253, %v331
  %333 = vmatmul.bf16.gmra.mxu0 %v269
  %v334 = vpop.f32.mrf.mxu0
  %v335 = vadd.f32 %v256, %v334
  %v336 = vpop.f32.mrf.mxu0
  %v337 = vadd.f32 %v258, %v336
  %338 = vdwg.mxu0
  %v339 = vld [vmem:[%s0] sm:$0xe]
  %v340 = vld [vmem:[%s0 + $0xc] sm:$0xe]
  %v341 = vunpack.c.l.bf16 %v339
  %v342 = vunpack.c.l.bf16 %v340
  %v343 = vmul.f32 %v341, %v30
  %v344 = vmul.f32 %v342, %v30
  %v345 = vadd.f32 %v343, %v38
  %v346 = vadd.f32 %v344, %v38
  %v347 = vmax.f32 %v345, 0.0
  %v348 = vmax.f32 %v346, 0.0
  %vm349 = vcmp.eq.s32.totalorder %v49, 15
  %vm350 = vcmp.eq.s32.totalorder %v50, 15
  %v351 = vsel %vm349, 1, 0
  %v352 = vsel %vm350, 1, 0
  %vm353 = vcmp.eq.s32.totalorder %v351, 1
  %vm354 = vcmp.eq.s32.totalorder %v352, 1
  %vm361 = vcmask 1045504
  %v362 = vrot.slane %v347, 2
  %v363 = vrot.slane %v106, 2
  %v364 = vsel %vm361, %v362, %v363
  %v365 = vrot.slane %v107, 2
  %v366 = vsel %vm361, %v363, %v365
  %v367 = vrot.slane %v348, 2
  %v368 = vrot.slane %v109, 2
  %v369 = vsel %vm361, %v367, %v368
  %v370 = vrot.slane %v110, 2
  %v371 = vsel %vm361, %v368, %v370
  %v376 = vsel %vm353, 0.0, %v364
  %v377 = vsel %vm354, 0.0, %v366
  %v378 = vsel %vm353, 0.0, %v369
  %v379 = vsel %vm354, 0.0, %v371
  %v380 = vpack.c.bf16 %v376, %v376
  %v381 = vpack.c.bf16 %v377, %v377
  %v382 = vpack.c.bf16 %v378, %v378
  %v383 = vpack.c.bf16 %v379, %v379
  %s384 = scalar_lea.vmem %s3, 128
  %v385 = vld [vmem:[%s384] sm:$0xf]
  %v386 = vld [vmem:[%s384 + $0x4] sm:$0xf]
  %v387 = vld [vmem:[%s384 + $0x8] sm:$0xf]
  %v388 = vld [vmem:[%s384 + $0xc] sm:$0xf]
  %v389 = vld [vmem:[%s384 + $0x10] sm:$0xf]
  %v390 = vld [vmem:[%s384 + $0x14] sm:$0xf]
  %v391 = vld [vmem:[%s384 + $0x18] sm:$0xf]
  %v392 = vld [vmem:[%s384 + $0x1c] sm:$0xf]
  %v393 = vld [vmem:[%s384 + $0x20] sm:$0xf]
  %v394 = vld [vmem:[%s384 + $0x24] sm:$0xf]
  %v395 = vld [vmem:[%s384 + $0x28] sm:$0xf]
  %v396 = vld [vmem:[%s384 + $0x2c] sm:$0xf]
  %v397 = vld [vmem:[%s384 + $0x30] sm:$0xf]
  %v398 = vld [vmem:[%s384 + $0x34] sm:$0xf]
  %v399 = vld [vmem:[%s384 + $0x38] sm:$0xf]
  %v400 = vld [vmem:[%s384 + $0x3c] sm:$0xf]
  %v405 = vunpack.c.l.b16 %v380
  %v406 = vunpack.c.l.b16 %v381
  %v407 = vunpack.c.l.b16 %v382
  %v408 = vunpack.c.l.b16 %v383
  %v409 = vpack.c.b16 %v406, %v405
  %v410 = vpack.c.b16 %v408, %v407
  %v429 = vunpack.c.l.b16 %v385
  %v430 = vunpack.c.l.b16 %v386
  %v431 = vunpack.c.l.b16 %v387
  %v432 = vunpack.c.l.b16 %v388
  %v433 = vunpack.c.l.b16 %v389
  %v434 = vunpack.c.l.b16 %v390
  %v435 = vunpack.c.l.b16 %v391
  %v436 = vunpack.c.l.b16 %v392
  %v437 = vunpack.c.l.b16 %v393
  %v438 = vunpack.c.l.b16 %v394
  %v439 = vunpack.c.l.b16 %v395
  %v440 = vunpack.c.l.b16 %v396
  %v441 = vunpack.c.l.b16 %v397
  %v442 = vunpack.c.l.b16 %v398
  %v443 = vunpack.c.l.b16 %v399
  %v444 = vunpack.c.l.b16 %v400
  %v445 = vpack.c.b16 %v430, %v429
  %v446 = vpack.c.b16 %v432, %v431
  %v447 = vpack.c.b16 %v434, %v433
  %v448 = vpack.c.b16 %v436, %v435
  %v449 = vpack.c.b16 %v438, %v437
  %v450 = vpack.c.b16 %v440, %v439
  %v451 = vpack.c.b16 %v442, %v441
  %v452 = vpack.c.b16 %v444, %v443
  %461 = vmatpush.bf16.msra.mxu0 %v452
  %462 = vmatpush.bf16.msra.mxu0 %v451
  %463 = vmatpush.bf16.msra.mxu0 %v450
  %464 = vmatpush.bf16.msra.mxu0 %v449
  %465 = vmatpush.bf16.msra.mxu0 %v448
  %466 = vmatpush.bf16.msra.mxu0 %v447
  %467 = vmatpush.bf16.msra.mxu0 %v446
  %468 = vmatpush.bf16.msra.mxu0 %v445
  %469 = vmatmul.bf16.gmra.mxu0 %v409
  %v470 = vpop.f32.mrf.mxu0
  %v471 = vadd.f32 0.0, %v470
  %v472 = vpop.f32.mrf.mxu0
  %v473 = vadd.f32 0.0, %v472
  %474 = vmatmul.bf16.gmra.mxu0 %v410
  %v475 = vpop.f32.mrf.mxu0
  %v476 = vadd.f32 0.0, %v475
  %v477 = vpop.f32.mrf.mxu0
  %v478 = vadd.f32 0.0, %v477
  %479 = vdwg.mxu0
  %v480 = vadd.f32 %v330, %v471
  %v481 = vadd.f32 %v332, %v473
  %v482 = vadd.f32 %v335, %v476
  %v483 = vadd.f32 %v337, %v478
  %v484 = vpack.c.bf16 %v480, %v480
  %v485 = vpack.c.bf16 %v481, %v481
  %v486 = vpack.c.bf16 %v482, %v482
  %v487 = vpack.c.bf16 %v483, %v483
  %488 = vst [vmem:[%s4] sm:$0xf] %v484
  %489 = vst [vmem:[%s4 + $0x4] sm:$0xf] %v485
  %490 = vst [vmem:[%s4 + $0x8] sm:$0xf] %v486
  %491 = vst [vmem:[%s4 + $0xc] sm:$0xf] %v487
  %v492 = vadd.f32 %v480, %v481
  %v493 = vrot.slane %v492, 4
  %v494 = vadd.f32 %v492, %v493
  %v495 = vrot.slane %v494, 2
  %v496 = vadd.f32 %v494, %v495
  %v497 = vrot.slane %v496, 1
  %v498 = vadd.f32 %v496, %v497
  %v499 = vadd.f32 %v482, %v483
  %v500 = vrot.slane %v499, 4
  %v501 = vadd.f32 %v499, %v500
  %v502 = vrot.slane %v501, 2
  %v503 = vadd.f32 %v501, %v502
  %v504 = vrot.slane %v503, 1
  %v505 = vadd.f32 %v503, %v504
  %506 = vst [vmem:[%s5] sm:$0x1] %v498
  %507 = vst [vmem:[%s5 + $0x1] sm:$0x1] %v505
  %v508 = vmul.f32 %v480, %v480
  %v509 = vmul.f32 %v481, %v481
  %v510 = vmul.f32 %v482, %v482
  %v511 = vmul.f32 %v483, %v483
  %v512 = vadd.f32 %v508, %v509
  %v513 = vrot.slane %v512, 4
  %v514 = vadd.f32 %v512, %v513
  %v515 = vrot.slane %v514, 2
  %v516 = vadd.f32 %v514, %v515
  %v517 = vrot.slane %v516, 1
  %v518 = vadd.f32 %v516, %v517
  %v519 = vadd.f32 %v510, %v511
  %v520 = vrot.slane %v519, 4
  %v521 = vadd.f32 %v519, %v520
  %v522 = vrot.slane %v521, 2
  %v523 = vadd.f32 %v521, %v522
  %v524 = vrot.slane %v523, 1
  %v525 = vadd.f32 %v523, %v524
  %526 = vst [vmem:[%s6] sm:$0x1] %v518
  %527 = vst [vmem:[%s6 + $0x1] sm:$0x1] %v525
  // Predicated region
  $region18: #{residual_block_forward.4} parent=0 // pred_check
    _
  $region19: #{residual_block_forward.4} parent=0 // pred_check_branch
    %529 = sbr.rel (0) target = $region21
  $region20: #{residual_block_forward.4} parent=0 // pred_region
    _
  $region21: #{residual_block_forward.4} parent=0 // pred_fallthru
    _
  // Predicated region
  $region22: #{residual_block_forward.4} parent=0 // pred_check
    _
  $region23: #{residual_block_forward.4} parent=0 // pred_check_branch
    %531 = sbr.rel (0) target = $region25
  $region24: #{residual_block_forward.4} parent=0 // pred_region
    _
  $region25: #{residual_block_forward.4} parent=0 // pred_fallthru
    _
  // Predicated region
  $region26: #{residual_block_forward.4} parent=0 // pred_check
    _
  $region27: #{residual_block_forward.4} parent=0 // pred_check_branch
    %533 = sbr.rel (0) target = $region29
  $region28: #{residual_block_forward.4} parent=0 // pred_region
    _
  $region29: #{residual_block_forward.4} parent=0 // pred_fallthru
    _
  // Predicated region
  $region30: #{residual_block_forward.4} parent=0 // pred_check
    _
  $region31: #{residual_block_forward.4} parent=0 // pred_check_branch
    %535 = sbr.rel (0) target = $region33
  $region32: #{residual_block_forward.4} parent=0 // pred_region
    _
  $region33: #{residual_block_forward.4} parent=0 // pred_fallthru
    _
  // Predicated region
  $region34: #{residual_block_forward.4} parent=0 // pred_check
    _
  $region35: #{residual_block_forward.4} parent=0 // pred_check_branch
    %537 = sbr.rel (0) target = $region37
  $region36: #{residual_block_forward.4} parent=0 // pred_region
    _
  $region37: #{residual_block_forward.4} parent=0 // pred_fallthru
    _
  // Predicated region
  $region38: #{residual_block_forward.4} parent=0 // pred_check
    _
  $region39: #{residual_block_forward.4} parent=0 // pred_check_branch
    %539 = sbr.rel (0) target = $region41
  $region40: #{residual_block_forward.4} parent=0 // pred_region
    _
  $region41: #{residual_block_forward.4} parent=0 // pred_fallthru
    _

// kernel: residual_block_forward.5
$region0: #{residual_block_forward.5}
  #allocation0 [shape = 'u32[]', space=smem, size = 0x4, offset = 0x4, fixed_abs, tag = 'smem constant byte address 0x4 - core index']
  #allocation1 [shape = 'u32[72,128]{1,0:T(1,128)}', space=vmem, size = 0x9000, scoped, tag = 'internal scratch']
  #allocation2 [shape = 's32[1]{0:T(128)S(6)}', space=smem, size = 0x200, scoped, tag = 'scoped memory for residual_block_forward.5']
  %s0 = inlined_call_operand.vmem [shape: bf16[2,16,128], index: 0, kind: input, shape index: {}]
  %s1 = inlined_call_operand.vmem [shape: f32[2,16,128], index: 1, kind: input, shape index: {}]
  %s2 = inlined_call_operand.vmem [shape: f32[1,1,128], index: 2, kind: input, shape index: {}]
  %s3 = inlined_call_operand.vmem [shape: f32[1,1,128], index: 3, kind: input, shape index: {}]
  %s4 = inlined_call_operand.vmem [shape: f32[2,1,128], index: 4, kind: input, shape index: {}]
  %s5 = inlined_call_operand.<no memory space> [shape: s32[1], index: 5, kind: input, shape index: {}]
  %s6 = inlined_call_operand.vmem [shape: f32[2,16,128], index: 6, kind: output, shape index: {}]
  %s7 = sld [smem:[#allocation0]]
  $region34: #{residual_block_forward.5} parent=0
    _
  %s9 = ssub.s32 1, %s7
  %s10 = scalar_select 0, %s9, %s7
  %11 = sst [smem:[#allocation2]] %s5
  // Predicated region
  $region2: #{residual_block_forward.5} parent=0 // pred_check
    _
  $region3: #{residual_block_forward.5} parent=0 // pred_check_branch
    %13 = sbr.rel (0) target = $region5
  $region4: #{residual_block_forward.5} parent=0 // pred_region
    _
  $region5: #{residual_block_forward.5} parent=0 // pred_fallthru
    _
  // Predicated region
  $region6: #{residual_block_forward.5} parent=0 // pred_check
    _
  $region7: #{residual_block_forward.5} parent=0 // pred_check_branch
    %15 = sbr.rel (0) target = $region9
  $region8: #{residual_block_forward.5} parent=0 // pred_region
    _
  $region9: #{residual_block_forward.5} parent=0 // pred_fallthru
    _
  // Predicated region
  $region10: #{residual_block_forward.5} parent=0 // pred_check
    _
  $region11: #{residual_block_forward.5} parent=0 // pred_check_branch
    %17 = sbr.rel (0) target = $region13
  $region12: #{residual_block_forward.5} parent=0 // pred_region
    _
  $region13: #{residual_block_forward.5} parent=0 // pred_fallthru
    _
  // Predicated region
  $region14: #{residual_block_forward.5} parent=0 // pred_check
    _
  $region15: #{residual_block_forward.5} parent=0 // pred_check_branch
    %19 = sbr.rel (0) target = $region17
  $region16: #{residual_block_forward.5} parent=0 // pred_region
    _
  $region17: #{residual_block_forward.5} parent=0 // pred_fallthru
    _
  // Predicated region
  $region18: #{residual_block_forward.5} parent=0 // pred_check
    _
  $region19: #{residual_block_forward.5} parent=0 // pred_check_branch
    %21 = sbr.rel (0) target = $region21
  $region20: #{residual_block_forward.5} parent=0 // pred_region
    _
  $region21: #{residual_block_forward.5} parent=0 // pred_fallthru
    _
  // Predicated region
  $region22: #{residual_block_forward.5} parent=0 // pred_check
    _
  $region23: #{residual_block_forward.5} parent=0 // pred_check_branch
    %23 = sbr.rel (0) target = $region25
  $region24: #{residual_block_forward.5} parent=0 // pred_region
    _
  $region25: #{residual_block_forward.5} parent=0 // pred_fallthru
    _
  %v24 = vld [vmem:[%s0] sm:$0xf]
  %v25 = vld [vmem:[%s0 + $0x4] sm:$0xf]
  %v26 = vld [vmem:[%s0 + $0x8] sm:$0xf]
  %v27 = vld [vmem:[%s0 + $0xc] sm:$0xf]
  %v28 = vunpack.c.l.bf16 %v24
  %v29 = vunpack.c.l.bf16 %v25
  %v30 = vunpack.c.l.bf16 %v26
  %v31 = vunpack.c.l.bf16 %v27
  %v32 = vld [vmem:[%s2] sm:$0x1]
  %v34 = vperm.slane %v32, 0
  %v36 = vmul.f32 %v28, %v34
  %v37 = vmul.f32 %v29, %v34
  %v38 = vmul.f32 %v30, %v34
  %v39 = vmul.f32 %v31, %v34
  %v40 = vld [vmem:[%s3] sm:$0x1]
  %v42 = vperm.slane %v40, 0
  %v44 = vadd.f32 %v36, %v42
  %v45 = vadd.f32 %v37, %v42
  %v46 = vadd.f32 %v38, %v42
  %v47 = vadd.f32 %v39, %v42
  %v48 = vld [vmem:[%s4] sm:$0x1]
  %v49 = vld [vmem:[%s4 + $0x1] sm:$0x1]
  %v52 = vperm.slane %v48, 0
  %v53 = vperm.slane %v49, 0
  %v56 = vmul.f32 %v44, %v52
  %v57 = vmul.f32 %v45, %v52
  %v58 = vmul.f32 %v46, %v53
  %v59 = vmul.f32 %v47, %v53
  %v60 = vld [vmem:[%s1] sm:$0xff]
  %v61 = vld [vmem:[%s1 + $0x8] sm:$0xff]
  %v62 = vld [vmem:[%s1 + $0x10] sm:$0xff]
  %v63 = vld [vmem:[%s1 + $0x18] sm:$0xff]
  %v64 = vadd.f32 %v56, %v60
  %v65 = vadd.f32 %v57, %v61
  %v66 = vadd.f32 %v58, %v62
  %v67 = vadd.f32 %v59, %v63
  %v68 = vmax.f32 %v64, 0.0
  %v69 = vmax.f32 %v65, 0.0
  %v70 = vmax.f32 %v66, 0.0
  %v71 = vmax.f32 %v67, 0.0
  %v72 = vlaneseq
  %v73 = vshrl.u32 %v72, 7
  %v74 = vadd.s32 %v73, 8
  %v75 = vlaneseq
  %v76 = vand.u32 %v75, 127
  %s77 = smul.u32 0, 2
  %v78 = vstv %s77
  %v79 = vadd.s32 %v78, 1
  %v80 = vmul.u32 %v78, 16
  %v81 = vmul.u32 %v79, 16
  %v82 = vadd.s32 %v80, %v73
  %v83 = vadd.s32 %v80, %v74
  %v84 = vadd.s32 %v81, %v73
  %v85 = vadd.s32 %v81, %v74
  %v86 = vmul.u32 %v82, 128
  %v87 = vmul.u32 %v83, 128
  %v88 = vmul.u32 %v84, 128
  %v89 = vmul.u32 %v85, 128
  %v90 = vadd.s32 %v86, %v76
  %v91 = vadd.s32 %v87, %v76
  %v92 = vadd.s32 %v88, %v76
  %v93 = vadd.s32 %v89, %v76
  %s94 = sld [smem:[#allocation2]]
  %s95 = smul.u32 %s94, 2654435761
  %v96 = vstv %s95
  %v97 = vadd.s32 %v90, %v96
  %v98 = vadd.s32 %v91, %v96
  %v99 = vadd.s32 %v92, %v96
  %v100 = vadd.s32 %v93, %v96
  %v101 = vshrl.u32 %v97, 16
  %v102 = vshrl.u32 %v98, 16
  %v103 = vshrl.u32 %v99, 16
  %v104 = vshrl.u32 %v100, 16
  %v105 = vxor.u32 %v97, %v101
  %v106 = vxor.u32 %v98, %v102
  %v107 = vxor.u32 %v99, %v103
  %v108 = vxor.u32 %v100, %v104
  %v109 = vmul.u32 %v105, 2146121005
  %v110 = vmul.u32 %v106, 2146121005
  %v111 = vmul.u32 %v107, 2146121005
  %v112 = vmul.u32 %v108, 2146121005
  %v113 = vshrl.u32 %v109, 15
  %v114 = vshrl.u32 %v110, 15
  %v115 = vshrl.u32 %v111, 15
  %v116 = vshrl.u32 %v112, 15
  %v117 = vxor.u32 %v109, %v113
  %v118 = vxor.u32 %v110, %v114
  %v119 = vxor.u32 %v111, %v115
  %v120 = vxor.u32 %v112, %v116
  %v121 = vmul.u32 %v117, 2221713035
  %v122 = vmul.u32 %v118, 2221713035
  %v123 = vmul.u32 %v119, 2221713035
  %v124 = vmul.u32 %v120, 2221713035
  %v125 = vshrl.u32 %v121, 16
  %v126 = vshrl.u32 %v122, 16
  %v127 = vshrl.u32 %v123, 16
  %v128 = vshrl.u32 %v124, 16
  %v129 = vxor.u32 %v121, %v125
  %v130 = vxor.u32 %v122, %v126
  %v131 = vxor.u32 %v123, %v127
  %v132 = vxor.u32 %v124, %v128
  %v133 = vshrl.u32 %v129, 8
  %v134 = vshrl.u32 %v130, 8
  %v135 = vshrl.u32 %v131, 8
  %v136 = vshrl.u32 %v132, 8
  %vm137 = vcmp.lt.s32.totalorder %v133, 11744051
  %vm138 = vcmp.lt.s32.totalorder %v134, 11744051
  %vm139 = vcmp.lt.s32.totalorder %v135, 11744051
  %vm140 = vcmp.lt.s32.totalorder %v136, 11744051
  %v141 = vmul.f32 %v68, 1.4285715
  %v142 = vmul.f32 %v69, 1.4285715
  %v143 = vmul.f32 %v70, 1.4285715
  %v144 = vmul.f32 %v71, 1.4285715
  %v145 = vsel %vm137, %v141, 0.0
  %v146 = vsel %vm138, %v142, 0.0
  %v147 = vsel %vm139, %v143, 0.0
  %v148 = vsel %vm140, %v144, 0.0
  %149 = vst [vmem:[%s6] sm:$0xff] %v145
  %150 = vst [vmem:[%s6 + $0x8] sm:$0xff] %v146
  %151 = vst [vmem:[%s6 + $0x10] sm:$0xff] %v147
  %152 = vst [vmem:[%s6 + $0x18] sm:$0xff] %v148
  // Predicated region
  $region26: #{residual_block_forward.5} parent=0 // pred_check
    _
  $region27: #{residual_block_forward.5} parent=0 // pred_check_branch
    %154 = sbr.rel (0) target = $region29
  $region28: #{residual_block_forward.5} parent=0 // pred_region
    _
  $region29: #{residual_block_forward.5} parent=0 // pred_fallthru
    _
  // Predicated region
  $region30: #{residual_block_forward.5} parent=0 // pred_check
    _
  $region31: #{residual_block_forward.5} parent=0 // pred_check_branch
    %156 = sbr.rel (0) target = $region33
  $region32: #{residual_block_forward.5} parent=0 // pred_region
    _
  $region33: #{residual_block_forward.5} parent=0 // pred_fallthru
    _

</llo_original>
